<compile_context>
chip_gen: v6e
topology: v6e:2x2x1
jax: 0.10.0
libtpu: 0.0.40
codegen_flags: <defaults>
</compile_context>

<pallas_src>
import numpy as np
import jax
import jax.numpy as jnp
from jax.experimental import pallas as pl
from jax.experimental.pallas import tpu as pltpu

REF_PRECISION = jax.lax.Precision.HIGHEST  # reference only (true-f32 golden)


# ---------------------------------------------------------------------------
# Kernel helpers (traced inside the Pallas kernel body)
# ---------------------------------------------------------------------------
def _conv1d_relu_batched(h2, n, l, w_ref, b_ref):
    """Conv1d (stride 1, 'same' padding) + ReLU for a whole batch block via im2col.

    h2:    (n*l, Cin)      channels-last activations, batch*length flattened
    w_ref: (K*Cin, Cout)   taps folded into the contraction dim (row = k*Cin + ci)
    b_ref: (1, Cout)
    returns (n*l, Cout)
    """
    c = h2.shape[-1]
    kcin, cout = w_ref.shape
    K = kcin // c
    pad = K // 2

    h3 = h2.reshape(n, l, c)
    zeros = jnp.zeros((n, pad, c), jnp.float32)
    hp = jnp.concatenate([zeros, h3, zeros], axis=1)                  # (n, l+2p, c)
    # im2col: stack the K shifted views along the lane (channel) axis -> one matmul.
    cols = jnp.concatenate([hp[:, k:k + l, :] for k in range(K)], axis=-1)  # (n, l, K*c)
    y = jnp.dot(cols.reshape(n * l, kcin), w_ref[...],
                preferred_element_type=jnp.float32)                   # single MXU matmul
    return jnp.maximum(y + b_ref[...], 0.0)


def _maxpool2(h2):
    """MaxPool1d(kernel=2, stride=2) over length; h2: (n*l, C) -> (n*l//2, C).

    Pairs never straddle sample boundaries because every per-sample length is even.
    """
    nl, c = h2.shape
    return jnp.max(h2.reshape(nl // 2, 2, c), axis=1)


def _softplus(x):
    """Numerically stable softplus, matching torch.nn.Softplus(beta=1)."""
    return jnp.maximum(x, 0.0) + jnp.log(1.0 + jnp.exp(-jnp.abs(x)))


# ---------------------------------------------------------------------------
# Pallas kernel: forward pass for one batch block (weights resident in VMEM)
# ---------------------------------------------------------------------------
def cnn1d_no_negative_kernel(x_ref,
                             w1_ref, b1_ref, w2_ref, b2_ref,
                             w3_ref, b3_ref, w4_ref, b4_ref,
                             fw1_ref, fb1_ref, fw2_ref, fb2_ref,
                             out_ref):
    bb, L, cin = x_ref.shape

    h = _conv1d_relu_batched(x_ref[...].reshape(bb * L, cin), bb, L, w1_ref, b1_ref)
    h = _conv1d_relu_batched(h, bb, L, w2_ref, b2_ref)                 # (bb*L, 32)
    h = _maxpool2(h)                                                   # (bb*L/2, 32)
    h = _conv1d_relu_batched(h, bb, L // 2, w3_ref, b3_ref)            # (bb*L/2, 64)
    h = _maxpool2(h)                                                   # (bb*L/4, 64)
    h = _conv1d_relu_batched(h, bb, L // 4, w4_ref, b4_ref)            # (bb*L/4, 128)

    # AdaptiveAvgPool1d(1): single reduce over the length axis of the batched tensor.
    feats = jnp.mean(h.reshape(bb, L // 4, h.shape[-1]), axis=1)       # (bb, 128)

    h1 = jnp.maximum(
        jnp.dot(feats, fw1_ref[...], preferred_element_type=jnp.float32) + fb1_ref[...],
        0.0)                                                           # fc1 + ReLU
    logits = jnp.dot(h1, fw2_ref[...],
                     preferred_element_type=jnp.float32) + fb2_ref[...]
    out_ref[...] = _softplus(logits)                                   # lane-dense (bb, 128k)


# ---------------------------------------------------------------------------
# Wrapper (parameter re-layout is glue; compute lives in the kernel)
# ---------------------------------------------------------------------------
def cnn1d_no_negative(x_ncl, params, *, batch_block=8):
    """x_ncl: (B, Cin, L) float32, PyTorch NCL convention."""
    B, Cin, L = x_ncl.shape
    assert L % 4 == 0, "length must be divisible by 4 (two MaxPool1d(2,2))"
    x_blc = jnp.transpose(x_ncl, (0, 2, 1)).astype(jnp.float32)        # (B, L, Cin)

    # Batch-block size: largest divisor of B that is <= batch_block.
    bb = min(batch_block, B)
    while B % bb:
        bb -= 1
    grid = (B // bb,)

    args = [x_blc]
    for name in ("conv1", "conv2", "conv3", "conv4"):
        w, b = params[name]                                            # (Cout, Cin, K), (Cout,)
        cout, cin, K = w.shape
        # (Cout, Cin, K) -> (K, Cin, Cout) -> (K*Cin, Cout): row index = k*Cin + ci.
        args.append(jnp.transpose(w, (2, 1, 0)).reshape(K * cin, cout))
        args.append(b.reshape(1, -1))
    fw1, fb1 = params["fc1"]                                           # (1024, 128), (1024,)
    args.append(fw1.T)                                                 # (128, 1024)
    args.append(fb1.reshape(1, -1))
    fw2, fb2 = params["fc2"]                                           # (out, 1024), (out,)
    out_size = fw2.shape[0]
    out_pad = ((out_size + 127) // 128) * 128                          # lane-dense output
    args.append(jnp.zeros((fw2.shape[1], out_pad), jnp.float32).at[:, :out_size].set(fw2.T))
    args.append(jnp.zeros((1, out_pad), jnp.float32).at[:, :out_size].set(fb2.reshape(1, -1)))

    def whole_spec(a):
        nd = a.ndim
        return pl.BlockSpec(a.shape, lambda i: (0,) * nd)              # resident across grid

    in_specs = [pl.BlockSpec((bb, L, Cin), lambda i: (i, 0, 0))]
    in_specs += [whole_spec(a) for a in args[1:]]
    out_specs = pl.BlockSpec((bb, out_pad), lambda i: (i, 0))

    out = pl.pallas_call(
        cnn1d_no_negative_kernel,
        out_shape=jax.ShapeDtypeStruct((B, out_pad), jnp.float32),
        grid=grid,
        in_specs=in_specs,
        out_specs=out_specs,
        compiler_params=pltpu.CompilerParams(dimension_semantics=("parallel",)),
    )(*args)
    return out[:, :out_size]


# ---------------------------------------------------------------------------
# Deterministic parameter init (PyTorch-default-style uniform bounds)
# ---------------------------------------------------------------------------
def init_params(key, in_channels, output_size):
    def conv_init(k, cout, cin, ksz):
        k1, k2 = jax.random.split(k)
        bound = 1.0 / np.sqrt(cin * ksz)
        w = jax.random.uniform(k1, (cout, cin, ksz), jnp.float32, -bound, bound)
        b = jax.random.uniform(k2, (cout,), jnp.float32, -bound, bound)
        return w, b

    def linear_init(k, cout, cin):
        k1, k2 = jax.random.split(k)
        bound = 1.0 / np.sqrt(cin)
        w = jax.random.uniform(k1, (cout, cin), jnp.float32, -bound, bound)
        b = jax.random.uniform(k2, (cout,), jnp.float32, -bound, bound)
        return w, b

    ks = jax.random.split(key, 6)
    return {
        "conv1": conv_init(ks[0], 32, in_channels, 5),
        "conv2": conv_init(ks[1], 32, 32, 3),
        "conv3": conv_init(ks[2], 64, 32, 3),
        "conv4": conv_init(ks[3], 128, 64, 3),
        "fc1": linear_init(ks[4], 1024, 128),
        "fc2": linear_init(ks[5], output_size, 1024),
    }


# ---------------------------------------------------------------------------
# Pure-JAX reference (mirrors the PyTorch module, full f32) for correctness
# ---------------------------------------------------------------------------
def reference_forward(x_ncl, params):
    def conv(x, w, b):
        pad = w.shape[-1] // 2
        y = jax.lax.conv_general_dilated(
            x, w, window_strides=(1,), padding=[(pad, pad)],
            dimension_numbers=("NCH", "OIH", "NCH"), precision=REF_PRECISION)
        return y + b[None, :, None]

    h = jax.nn.relu(conv(x_ncl, *params["conv1"]))
    h = jax.nn.relu(conv(h, *params["conv2"]))
    B, C, L = h.shape
    h = h.reshape(B, C, L // 2, 2).max(-1)          # MaxPool1d(2, 2)
    h = jax.nn.relu(conv(h, *params["conv3"]))
    B, C, L = h.shape
    h = h.reshape(B, C, L // 2, 2).max(-1)          # MaxPool1d(2, 2)
    h = jax.nn.relu(conv(h, *params["conv4"]))
    feats = h.mean(-1)                              # AdaptiveAvgPool1d(1)

    w1, b1 = params["fc1"]
    w2, b2 = params["fc2"]
    h = jax.nn.relu(jnp.dot(feats, w1.T, precision=REF_PRECISION) + b1)
    logits = jnp.dot(h, w2.T, precision=REF_PRECISION) + b2
    return jax.nn.softplus(logits)


if __name__ == "__main__":
    key = jax.random.PRNGKey(0)
    B, Cin, L, out_size = 2, 4, 16, 10   # small shapes; L divisible by 4

    pkey, xkey = jax.random.split(key)
    params = init_params(pkey, Cin, out_size)
    x = jax.random.normal(xkey, (B, Cin, L), jnp.float32)

    y = jax.block_until_ready(cnn1d_no_negative(x, params))
    y_ref = jax.block_until_ready(reference_forward(x, params))

    # Kernel matmuls run at default (bf16-MXU, f32-accumulate) precision; reference is
    # full f32, so the comparison tolerance is loosened accordingly.
    np.testing.assert_allclose(np.asarray(y), np.asarray(y_ref), rtol=5e-2, atol=5e-2)
    assert y.shape == (B, out_size)
    assert bool(jnp.all(y >= 0.0))  # "NoNegative": softplus output

    print("KERNEL_OK")
</pallas_src>

<mosaic_0001>
module attributes {stable_mosaic.version = 11 : i64} {
  func.func @cnn1d_no_negative_kernel(%arg0: i32, %arg1: memref<2x16x4xf32, #tpu.memory_space<vmem>>, %arg2: memref<20x32xf32, #tpu.memory_space<vmem>>, %arg3: memref<1x32xf32, #tpu.memory_space<vmem>>, %arg4: memref<96x32xf32, #tpu.memory_space<vmem>>, %arg5: memref<1x32xf32, #tpu.memory_space<vmem>>, %arg6: memref<96x64xf32, #tpu.memory_space<vmem>>, %arg7: memref<1x64xf32, #tpu.memory_space<vmem>>, %arg8: memref<192x128xf32, #tpu.memory_space<vmem>>, %arg9: memref<1x128xf32, #tpu.memory_space<vmem>>, %arg10: memref<128x1024xf32, #tpu.memory_space<vmem>>, %arg11: memref<1x1024xf32, #tpu.memory_space<vmem>>, %arg12: memref<1024x128xf32, #tpu.memory_space<vmem>>, %arg13: memref<1x128xf32, #tpu.memory_space<vmem>>, %arg14: memref<2x128xf32, #tpu.memory_space<vmem>>) attributes {dimension_semantics = [#tpu.dimension_semantics<parallel>], iteration_bounds = array<i64: 1>, scalar_prefetch = 0 : i64, scratch_operands = 0 : i64, tpu.core_type = #tpu.core_type<tc>, window_params = [{transform_indices = @transform_0, window_bounds = array<i64: 2, 16, 4>}, {pipeline_mode = #tpu.pipeline_mode<synchronous>, transform_indices = @transform_1, window_bounds = array<i64: 20, 32>}, {pipeline_mode = #tpu.pipeline_mode<synchronous>, transform_indices = @transform_2, window_bounds = array<i64: 1, 32>}, {pipeline_mode = #tpu.pipeline_mode<synchronous>, transform_indices = @transform_3, window_bounds = array<i64: 96, 32>}, {pipeline_mode = #tpu.pipeline_mode<synchronous>, transform_indices = @transform_4, window_bounds = array<i64: 1, 32>}, {pipeline_mode = #tpu.pipeline_mode<synchronous>, transform_indices = @transform_5, window_bounds = array<i64: 96, 64>}, {pipeline_mode = #tpu.pipeline_mode<synchronous>, transform_indices = @transform_6, window_bounds = array<i64: 1, 64>}, {pipeline_mode = #tpu.pipeline_mode<synchronous>, transform_indices = @transform_7, window_bounds = array<i64: 192, 128>}, {pipeline_mode = #tpu.pipeline_mode<synchronous>, transform_indices = @transform_8, window_bounds = array<i64: 1, 128>}, {pipeline_mode = #tpu.pipeline_mode<synchronous>, transform_indices = @transform_9, window_bounds = array<i64: 128, 1024>}, {pipeline_mode = #tpu.pipeline_mode<synchronous>, transform_indices = @transform_10, window_bounds = array<i64: 1, 1024>}, {pipeline_mode = #tpu.pipeline_mode<synchronous>, transform_indices = @transform_11, window_bounds = array<i64: 1024, 128>}, {pipeline_mode = #tpu.pipeline_mode<synchronous>, transform_indices = @transform_12, window_bounds = array<i64: 1, 128>}, {transform_indices = @transform_13, window_bounds = array<i64: 2, 128>}]} {
    %c0 = arith.constant 0 : index
    %c0_0 = arith.constant 0 : index
    %c0_1 = arith.constant 0 : index
    %0 = vector.load %arg1[%c0, %c0_0, %c0_1] : memref<2x16x4xf32, #tpu.memory_space<vmem>>, vector<2x16x4xf32>
    %1 = vector.shape_cast %0 : vector<2x16x4xf32> to vector<32x4xf32>
    %2 = vector.shape_cast %1 : vector<32x4xf32> to vector<2x16x4xf32>
    %cst = arith.constant 0.000000e+00 : f32
    %3 = vector.broadcast %cst : f32 to vector<2x2x4xf32>
    %4 = tpu.concatenate %3, %2, %3 in 1 : vector<2x2x4xf32>, vector<2x16x4xf32>, vector<2x2x4xf32> -> vector<2x20x4xf32>
    %5 = vector.extract_strided_slice %4 {offsets = [0, 0, 0], sizes = [2, 16, 4], strides = [1, 1, 1]} : vector<2x20x4xf32> to vector<2x16x4xf32>
    %6 = vector.extract_strided_slice %4 {offsets = [0, 1, 0], sizes = [2, 16, 4], strides = [1, 1, 1]} : vector<2x20x4xf32> to vector<2x16x4xf32>
    %7 = vector.extract_strided_slice %4 {offsets = [0, 2, 0], sizes = [2, 16, 4], strides = [1, 1, 1]} : vector<2x20x4xf32> to vector<2x16x4xf32>
    %8 = vector.extract_strided_slice %4 {offsets = [0, 3, 0], sizes = [2, 16, 4], strides = [1, 1, 1]} : vector<2x20x4xf32> to vector<2x16x4xf32>
    %9 = vector.extract_strided_slice %4 {offsets = [0, 4, 0], sizes = [2, 16, 4], strides = [1, 1, 1]} : vector<2x20x4xf32> to vector<2x16x4xf32>
    %10 = tpu.concatenate %5, %6, %7, %8, %9 in 2 : vector<2x16x4xf32>, vector<2x16x4xf32>, vector<2x16x4xf32>, vector<2x16x4xf32>, vector<2x16x4xf32> -> vector<2x16x20xf32>
    %11 = vector.shape_cast %10 : vector<2x16x20xf32> to vector<32x20xf32>
    %c0_2 = arith.constant 0 : index
    %c0_3 = arith.constant 0 : index
    %12 = vector.load %arg2[%c0_2, %c0_3] : memref<20x32xf32, #tpu.memory_space<vmem>>, vector<20x32xf32>
    %cst_4 = arith.constant dense<0.000000e+00> : vector<32x32xf32>
    %13 = tpu.matmul %11, %12, %cst_4 {dimension_numbers = #tpu.dot_dimension_numbers<[1], [0], [0], [1], [0, 0, 1, 1], [], []>} : vector<32x20xf32>, vector<20x32xf32>, vector<32x32xf32> -> vector<32x32xf32>
    %c0_5 = arith.constant 0 : index
    %c0_6 = arith.constant 0 : index
    %14 = vector.load %arg3[%c0_5, %c0_6] : memref<1x32xf32, #tpu.memory_space<vmem>>, vector<1x32xf32>
    %15 = vector.broadcast %14 : vector<1x32xf32> to vector<32x32xf32>
    %16 = arith.addf %13, %15 : vector<32x32xf32>
    %cst_7 = arith.constant 0.000000e+00 : f32
    %17 = vector.broadcast %cst_7 : f32 to vector<32x32xf32>
    %18 = arith.maximumf %16, %17 : vector<32x32xf32>
    %19 = vector.shape_cast %18 : vector<32x32xf32> to vector<2x16x32xf32>
    %cst_8 = arith.constant 0.000000e+00 : f32
    %20 = vector.broadcast %cst_8 : f32 to vector<2x1x32xf32>
    %21 = tpu.concatenate %20, %19, %20 in 1 : vector<2x1x32xf32>, vector<2x16x32xf32>, vector<2x1x32xf32> -> vector<2x18x32xf32>
    %22 = vector.extract_strided_slice %21 {offsets = [0, 0, 0], sizes = [2, 16, 32], strides = [1, 1, 1]} : vector<2x18x32xf32> to vector<2x16x32xf32>
    %23 = vector.extract_strided_slice %21 {offsets = [0, 1, 0], sizes = [2, 16, 32], strides = [1, 1, 1]} : vector<2x18x32xf32> to vector<2x16x32xf32>
    %24 = vector.extract_strided_slice %21 {offsets = [0, 2, 0], sizes = [2, 16, 32], strides = [1, 1, 1]} : vector<2x18x32xf32> to vector<2x16x32xf32>
    %25 = tpu.concatenate %22, %23, %24 in 2 : vector<2x16x32xf32>, vector<2x16x32xf32>, vector<2x16x32xf32> -> vector<2x16x96xf32>
    %26 = vector.shape_cast %25 : vector<2x16x96xf32> to vector<32x96xf32>
    %c0_9 = arith.constant 0 : index
    %c0_10 = arith.constant 0 : index
    %27 = vector.load %arg4[%c0_9, %c0_10] : memref<96x32xf32, #tpu.memory_space<vmem>>, vector<96x32xf32>
    %cst_11 = arith.constant dense<0.000000e+00> : vector<32x32xf32>
    %28 = tpu.matmul %26, %27, %cst_11 {dimension_numbers = #tpu.dot_dimension_numbers<[1], [0], [0], [1], [0, 0, 1, 1], [], []>} : vector<32x96xf32>, vector<96x32xf32>, vector<32x32xf32> -> vector<32x32xf32>
    %c0_12 = arith.constant 0 : index
    %c0_13 = arith.constant 0 : index
    %29 = vector.load %arg5[%c0_12, %c0_13] : memref<1x32xf32, #tpu.memory_space<vmem>>, vector<1x32xf32>
    %30 = vector.broadcast %29 : vector<1x32xf32> to vector<32x32xf32>
    %31 = arith.addf %28, %30 : vector<32x32xf32>
    %cst_14 = arith.constant 0.000000e+00 : f32
    %32 = vector.broadcast %cst_14 : f32 to vector<32x32xf32>
    %33 = arith.maximumf %31, %32 : vector<32x32xf32>
    %34 = vector.shape_cast %33 : vector<32x32xf32> to vector<16x2x32xf32>
    %cst_15 = arith.constant dense<0xFF800000> : vector<16x32xf32>
    %35 = vector.multi_reduction <maximumf>, %34, %cst_15 [1] : vector<16x2x32xf32> to vector<16x32xf32>
    %36 = vector.shape_cast %35 : vector<16x32xf32> to vector<2x8x32xf32>
    %cst_16 = arith.constant 0.000000e+00 : f32
    %37 = vector.broadcast %cst_16 : f32 to vector<2x1x32xf32>
    %38 = tpu.concatenate %37, %36, %37 in 1 : vector<2x1x32xf32>, vector<2x8x32xf32>, vector<2x1x32xf32> -> vector<2x10x32xf32>
    %39 = vector.extract_strided_slice %38 {offsets = [0, 0, 0], sizes = [2, 8, 32], strides = [1, 1, 1]} : vector<2x10x32xf32> to vector<2x8x32xf32>
    %40 = vector.extract_strided_slice %38 {offsets = [0, 1, 0], sizes = [2, 8, 32], strides = [1, 1, 1]} : vector<2x10x32xf32> to vector<2x8x32xf32>
    %41 = vector.extract_strided_slice %38 {offsets = [0, 2, 0], sizes = [2, 8, 32], strides = [1, 1, 1]} : vector<2x10x32xf32> to vector<2x8x32xf32>
    %42 = tpu.concatenate %39, %40, %41 in 2 : vector<2x8x32xf32>, vector<2x8x32xf32>, vector<2x8x32xf32> -> vector<2x8x96xf32>
    %43 = vector.shape_cast %42 : vector<2x8x96xf32> to vector<16x96xf32>
    %c0_17 = arith.constant 0 : index
    %c0_18 = arith.constant 0 : index
    %44 = vector.load %arg6[%c0_17, %c0_18] : memref<96x64xf32, #tpu.memory_space<vmem>>, vector<96x64xf32>
    %cst_19 = arith.constant dense<0.000000e+00> : vector<16x64xf32>
    %45 = tpu.matmul %43, %44, %cst_19 {dimension_numbers = #tpu.dot_dimension_numbers<[1], [0], [0], [1], [0, 0, 1, 1], [], []>} : vector<16x96xf32>, vector<96x64xf32>, vector<16x64xf32> -> vector<16x64xf32>
    %c0_20 = arith.constant 0 : index
    %c0_21 = arith.constant 0 : index
    %46 = vector.load %arg7[%c0_20, %c0_21] : memref<1x64xf32, #tpu.memory_space<vmem>>, vector<1x64xf32>
    %47 = vector.broadcast %46 : vector<1x64xf32> to vector<16x64xf32>
    %48 = arith.addf %45, %47 : vector<16x64xf32>
    %cst_22 = arith.constant 0.000000e+00 : f32
    %49 = vector.broadcast %cst_22 : f32 to vector<16x64xf32>
    %50 = arith.maximumf %48, %49 : vector<16x64xf32>
    %51 = vector.shape_cast %50 : vector<16x64xf32> to vector<8x2x64xf32>
    %cst_23 = arith.constant dense<0xFF800000> : vector<8x64xf32>
    %52 = vector.multi_reduction <maximumf>, %51, %cst_23 [1] : vector<8x2x64xf32> to vector<8x64xf32>
    %53 = vector.shape_cast %52 : vector<8x64xf32> to vector<2x4x64xf32>
    %cst_24 = arith.constant 0.000000e+00 : f32
    %54 = vector.broadcast %cst_24 : f32 to vector<2x1x64xf32>
    %55 = tpu.concatenate %54, %53, %54 in 1 : vector<2x1x64xf32>, vector<2x4x64xf32>, vector<2x1x64xf32> -> vector<2x6x64xf32>
    %56 = vector.extract_strided_slice %55 {offsets = [0, 0, 0], sizes = [2, 4, 64], strides = [1, 1, 1]} : vector<2x6x64xf32> to vector<2x4x64xf32>
    %57 = vector.extract_strided_slice %55 {offsets = [0, 1, 0], sizes = [2, 4, 64], strides = [1, 1, 1]} : vector<2x6x64xf32> to vector<2x4x64xf32>
    %58 = vector.extract_strided_slice %55 {offsets = [0, 2, 0], sizes = [2, 4, 64], strides = [1, 1, 1]} : vector<2x6x64xf32> to vector<2x4x64xf32>
    %59 = tpu.concatenate %56, %57, %58 in 2 : vector<2x4x64xf32>, vector<2x4x64xf32>, vector<2x4x64xf32> -> vector<2x4x192xf32>
    %60 = vector.shape_cast %59 : vector<2x4x192xf32> to vector<8x192xf32>
    %c0_25 = arith.constant 0 : index
    %c0_26 = arith.constant 0 : index
    %61 = vector.load %arg8[%c0_25, %c0_26] : memref<192x128xf32, #tpu.memory_space<vmem>>, vector<192x128xf32>
    %cst_27 = arith.constant dense<0.000000e+00> : vector<8x128xf32>
    %62 = tpu.matmul %60, %61, %cst_27 {dimension_numbers = #tpu.dot_dimension_numbers<[1], [0], [0], [1], [0, 0, 1, 1], [], []>} : vector<8x192xf32>, vector<192x128xf32>, vector<8x128xf32> -> vector<8x128xf32>
    %c0_28 = arith.constant 0 : index
    %c0_29 = arith.constant 0 : index
    %63 = vector.load %arg9[%c0_28, %c0_29] : memref<1x128xf32, #tpu.memory_space<vmem>>, vector<1x128xf32>
    %64 = vector.broadcast %63 : vector<1x128xf32> to vector<8x128xf32>
    %65 = arith.addf %62, %64 : vector<8x128xf32>
    %cst_30 = arith.constant 0.000000e+00 : f32
    %66 = vector.broadcast %cst_30 : f32 to vector<8x128xf32>
    %67 = arith.maximumf %65, %66 : vector<8x128xf32>
    %68 = vector.shape_cast %67 : vector<8x128xf32> to vector<2x4x128xf32>
    %cst_31 = arith.constant dense<0.000000e+00> : vector<2x128xf32>
    %69 = vector.multi_reduction <add>, %68, %cst_31 [1] : vector<2x4x128xf32> to vector<2x128xf32>
    %cst_32 = arith.constant 4.000000e+00 : f32
    %70 = vector.broadcast %cst_32 : f32 to vector<2x128xf32>
    %71 = arith.divf %69, %70 : vector<2x128xf32>
    %c0_33 = arith.constant 0 : index
    %c0_34 = arith.constant 0 : index
    %72 = vector.load %arg10[%c0_33, %c0_34] : memref<128x1024xf32, #tpu.memory_space<vmem>>, vector<128x1024xf32>
    %cst_35 = arith.constant dense<0.000000e+00> : vector<2x1024xf32>
    %73 = tpu.matmul %71, %72, %cst_35 {dimension_numbers = #tpu.dot_dimension_numbers<[1], [0], [0], [1], [0, 0, 1, 1], [], []>} : vector<2x128xf32>, vector<128x1024xf32>, vector<2x1024xf32> -> vector<2x1024xf32>
    %c0_36 = arith.constant 0 : index
    %c0_37 = arith.constant 0 : index
    %74 = vector.load %arg11[%c0_36, %c0_37] : memref<1x1024xf32, #tpu.memory_space<vmem>>, vector<1x1024xf32>
    %75 = vector.broadcast %74 : vector<1x1024xf32> to vector<2x1024xf32>
    %76 = arith.addf %73, %75 : vector<2x1024xf32>
    %cst_38 = arith.constant 0.000000e+00 : f32
    %77 = vector.broadcast %cst_38 : f32 to vector<2x1024xf32>
    %78 = arith.maximumf %76, %77 : vector<2x1024xf32>
    %c0_39 = arith.constant 0 : index
    %c0_40 = arith.constant 0 : index
    %79 = vector.load %arg12[%c0_39, %c0_40] : memref<1024x128xf32, #tpu.memory_space<vmem>>, vector<1024x128xf32>
    %cst_41 = arith.constant dense<0.000000e+00> : vector<2x128xf32>
    %80 = tpu.matmul %78, %79, %cst_41 {dimension_numbers = #tpu.dot_dimension_numbers<[1], [0], [0], [1], [0, 0, 1, 1], [], []>} : vector<2x1024xf32>, vector<1024x128xf32>, vector<2x128xf32> -> vector<2x128xf32>
    %c0_42 = arith.constant 0 : index
    %c0_43 = arith.constant 0 : index
    %81 = vector.load %arg13[%c0_42, %c0_43] : memref<1x128xf32, #tpu.memory_space<vmem>>, vector<1x128xf32>
    %82 = vector.broadcast %81 : vector<1x128xf32> to vector<2x128xf32>
    %83 = arith.addf %80, %82 : vector<2x128xf32>
    %cst_44 = arith.constant 0.000000e+00 : f32
    %84 = vector.broadcast %cst_44 : f32 to vector<2x128xf32>
    %85 = arith.maximumf %83, %84 : vector<2x128xf32>
    %86 = math.absf %83 : vector<2x128xf32>
    %cst_45 = arith.constant 0.000000e+00 : f32
    %87 = vector.broadcast %cst_45 : f32 to vector<2x128xf32>
    %88 = arith.subf %87, %86 : vector<2x128xf32>
    %89 = math.exp %88 : vector<2x128xf32>
    %cst_46 = arith.constant 1.000000e+00 : f32
    %90 = vector.broadcast %cst_46 : f32 to vector<2x128xf32>
    %91 = arith.addf %90, %89 : vector<2x128xf32>
    %92 = math.log %91 : vector<2x128xf32>
    %93 = arith.addf %85, %92 : vector<2x128xf32>
    %c0_47 = arith.constant 0 : index
    %c0_48 = arith.constant 0 : index
    %94 = vector.load %arg14[%c0_47, %c0_48] : memref<2x128xf32, #tpu.memory_space<vmem>>, vector<2x128xf32>
    tpu.vector_store %arg14[%c0_47, %c0_48], %93 {strides = array<i32>} : memref<2x128xf32, #tpu.memory_space<vmem>>, vector<2x128xf32>,
    return
  }
  func.func @transform_0(%arg0: i32) -> (i32, i32, i32) {
    %c0_i32 = arith.constant 0 : i32
    %c0_i32_0 = arith.constant 0 : i32
    %c0_i32_1 = arith.constant 0 : i32
    return %arg0, %c0_i32, %c0_i32_0 : i32, i32, i32
  }
  func.func @transform_1(%arg0: i32) -> (i32, i32) {
    %c0_i32 = arith.constant 0 : i32
    %c0_i32_0 = arith.constant 0 : i32
    %c0_i32_1 = arith.constant 0 : i32
    return %c0_i32, %c0_i32_0 : i32, i32
  }
  func.func @transform_2(%arg0: i32) -> (i32, i32) {
    %c0_i32 = arith.constant 0 : i32
    %c0_i32_0 = arith.constant 0 : i32
    %c0_i32_1 = arith.constant 0 : i32
    return %c0_i32, %c0_i32_0 : i32, i32
  }
  func.func @transform_3(%arg0: i32) -> (i32, i32) {
    %c0_i32 = arith.constant 0 : i32
    %c0_i32_0 = arith.constant 0 : i32
    %c0_i32_1 = arith.constant 0 : i32
    return %c0_i32, %c0_i32_0 : i32, i32
  }
  func.func @transform_4(%arg0: i32) -> (i32, i32) {
    %c0_i32 = arith.constant 0 : i32
    %c0_i32_0 = arith.constant 0 : i32
    %c0_i32_1 = arith.constant 0 : i32
    return %c0_i32, %c0_i32_0 : i32, i32
  }
  func.func @transform_5(%arg0: i32) -> (i32, i32) {
    %c0_i32 = arith.constant 0 : i32
    %c0_i32_0 = arith.constant 0 : i32
    %c0_i32_1 = arith.constant 0 : i32
    return %c0_i32, %c0_i32_0 : i32, i32
  }
  func.func @transform_6(%arg0: i32) -> (i32, i32) {
    %c0_i32 = arith.constant 0 : i32
    %c0_i32_0 = arith.constant 0 : i32
    %c0_i32_1 = arith.constant 0 : i32
    return %c0_i32, %c0_i32_0 : i32, i32
  }
  func.func @transform_7(%arg0: i32) -> (i32, i32) {
    %c0_i32 = arith.constant 0 : i32
    %c0_i32_0 = arith.constant 0 : i32
    %c0_i32_1 = arith.constant 0 : i32
    return %c0_i32, %c0_i32_0 : i32, i32
  }
  func.func @transform_8(%arg0: i32) -> (i32, i32) {
    %c0_i32 = arith.constant 0 : i32
    %c0_i32_0 = arith.constant 0 : i32
    %c0_i32_1 = arith.constant 0 : i32
    return %c0_i32, %c0_i32_0 : i32, i32
  }
  func.func @transform_9(%arg0: i32) -> (i32, i32) {
    %c0_i32 = arith.constant 0 : i32
    %c0_i32_0 = arith.constant 0 : i32
    %c0_i32_1 = arith.constant 0 : i32
    return %c0_i32, %c0_i32_0 : i32, i32
  }
  func.func @transform_10(%arg0: i32) -> (i32, i32) {
    %c0_i32 = arith.constant 0 : i32
    %c0_i32_0 = arith.constant 0 : i32
    %c0_i32_1 = arith.constant 0 : i32
    return %c0_i32, %c0_i32_0 : i32, i32
  }
  func.func @transform_11(%arg0: i32) -> (i32, i32) {
    %c0_i32 = arith.constant 0 : i32
    %c0_i32_0 = arith.constant 0 : i32
    %c0_i32_1 = arith.constant 0 : i32
    return %c0_i32, %c0_i32_0 : i32, i32
  }
  func.func @transform_12(%arg0: i32) -> (i32, i32) {
    %c0_i32 = arith.constant 0 : i32
    %c0_i32_0 = arith.constant 0 : i32
    %c0_i32_1 = arith.constant 0 : i32
    return %c0_i32, %c0_i32_0 : i32, i32
  }
  func.func @transform_13(%arg0: i32) -> (i32, i32) {
    %c0_i32 = arith.constant 0 : i32
    %c0_i32_0 = arith.constant 0 : i32
    return %arg0, %c0_i32 : i32, i32
  }
}

</mosaic_0001>

<llo_original>
// kernel: tpu_custom_call.1
$region0: #{tpu_custom_call.1}
  #allocation0 [shape = 'u32[]', space=smem, size = 0x4, offset = 0x4, fixed_abs, tag = 'smem constant byte address 0x4 - core index']
  #allocation1 [shape = 'u32[144,128]{1,0:T(1,128)}', space=vmem, size = 0x12000, scoped, tag = 'internal scratch']
  %s0 = inlined_call_operand.vmem [shape: f32[2,16,4], index: 0, kind: input, shape index: {}]
  %s1 = inlined_call_operand.vmem [shape: f32[20,32], index: 1, kind: input, shape index: {}]
  %s2 = inlined_call_operand.vmem [shape: f32[1,32], index: 2, kind: input, shape index: {}]
  %s3 = inlined_call_operand.vmem [shape: f32[96,32], index: 3, kind: input, shape index: {}]
  %s4 = inlined_call_operand.vmem [shape: f32[1,32], index: 4, kind: input, shape index: {}]
  %s5 = inlined_call_operand.vmem [shape: f32[96,64], index: 5, kind: input, shape index: {}]
  %s6 = inlined_call_operand.vmem [shape: f32[1,64], index: 6, kind: input, shape index: {}]
  %s7 = inlined_call_operand.vmem [shape: f32[192,128], index: 7, kind: input, shape index: {}]
  %s8 = inlined_call_operand.vmem [shape: f32[1,128], index: 8, kind: input, shape index: {}]
  %s9 = inlined_call_operand.hbm [shape: f32[128,1024], index: 9, kind: input, shape index: {}]
  %s10 = inlined_call_operand.vmem [shape: f32[1,1024], index: 10, kind: input, shape index: {}]
  %s11 = inlined_call_operand.hbm [shape: f32[1024,128], index: 11, kind: input, shape index: {}]
  %s12 = inlined_call_operand.vmem [shape: f32[1,128], index: 12, kind: input, shape index: {}]
  %s13 = inlined_call_operand.hbm [shape: f32[2,128], index: 13, kind: output, shape index: {}]
  %s14 = sld [smem:[#allocation0]]
  $region70: #{tpu_custom_call.1} parent=0
    _
  %s16 = ssub.s32 1, %s14
  %s17 = scalar_select 0, %s16, %s14
  $region1: #{tpu_custom_call.1} parent=0
    #allocation2 [shape = 'u8[524288]{0}', space=vmem, size = 0x80000, scoped, tag = 'input window, operand 9, single buffered']
    #allocation3 [shape = 's32[1]{0}', space=sflag, size = 0x4, scoped, tag = 'scoped memory for tpu_custom_call.1']
    #allocation4 [shape = 's32[1]{0}', space=sflag, size = 0x4, scoped, tag = 'scoped memory for tpu_custom_call.1']
    #allocation5 [shape = 'u8[524288]{0}', space=vmem, size = 0x80000, scoped, tag = 'input window, operand 11, single buffered']
    #allocation6 [shape = 's32[1]{0}', space=sflag, size = 0x4, scoped, tag = 'scoped memory for tpu_custom_call.1']
    #allocation7 [shape = 'u8[1024]{0}', space=vmem, size = 0x400, scoped, tag = 'output window, operand 0, single buffered']
    %18 = vsyncpa [#allocation3], 0
    %19 = vsyncpa [#allocation6], 0
    %20 = vsyncpa [#allocation4], 0
    // Predicated region
    $region2: #{tpu_custom_call.1} parent=1 // pred_check
      _
    $region3: #{tpu_custom_call.1} parent=1 // pred_check_branch
      %22 = sbr.rel (0) target = $region5
    $region4: #{tpu_custom_call.1} parent=1 // pred_region
      _
    $region5: #{tpu_custom_call.1} parent=1 // pred_fallthru
      _
    // Predicated region
    $region6: #{tpu_custom_call.1} parent=1 // pred_check
      _
    $region7: #{tpu_custom_call.1} parent=1 // pred_check_branch
      %24 = sbr.rel (0) target = $region9
    $region8: #{tpu_custom_call.1} parent=1 // pred_region
      _
    $region9: #{tpu_custom_call.1} parent=1 // pred_fallthru
      _
    // Predicated region
    $region10: #{tpu_custom_call.1} parent=1 // pred_check
      _
    $region11: #{tpu_custom_call.1} parent=1 // pred_check_branch
      %26 = sbr.rel (0) target = $region13
    $region12: #{tpu_custom_call.1} parent=1 // pred_region
      _
    $region13: #{tpu_custom_call.1} parent=1 // pred_fallthru
      _
    // Predicated region
    $region14: #{tpu_custom_call.1} parent=1 // pred_check
      _
    $region15: #{tpu_custom_call.1} parent=1 // pred_check_branch
      %28 = sbr.rel (0) target = $region17
    $region16: #{tpu_custom_call.1} parent=1 // pred_region
      _
    $region17: #{tpu_custom_call.1} parent=1 // pred_fallthru
      _
    // Predicated region
    $region18: #{tpu_custom_call.1} parent=1 // pred_check
      _
    $region19: #{tpu_custom_call.1} parent=1 // pred_check_branch
      %30 = sbr.rel (0) target = $region21
    $region20: #{tpu_custom_call.1} parent=1 // pred_region
      _
    $region21: #{tpu_custom_call.1} parent=1 // pred_fallthru
      _
    // Predicated region
    $region22: #{tpu_custom_call.1} parent=1 // pred_check
      _
    $region23: #{tpu_custom_call.1} parent=1 // pred_check_branch
      %32 = sbr.rel (0) target = $region25
    $region24: #{tpu_custom_call.1} parent=1 // pred_region
      _
    $region25: #{tpu_custom_call.1} parent=1 // pred_fallthru
      _
    // Predicated region
    $region26: #{tpu_custom_call.1} parent=1 // pred_check
      _
    $region27: #{tpu_custom_call.1} parent=1 // pred_check_branch
      %34 = sbr.rel (0) target = $region29
    $region28: #{tpu_custom_call.1} parent=1 // pred_region
      _
    $region29: #{tpu_custom_call.1} parent=1 // pred_fallthru
      _
    // Predicated region
    $region30: #{tpu_custom_call.1} parent=1 // pred_check
      _
    $region31: #{tpu_custom_call.1} parent=1 // pred_check_branch
      %36 = sbr.rel (0) target = $region33
    $region32: #{tpu_custom_call.1} parent=1 // pred_region
      _
    $region33: #{tpu_custom_call.1} parent=1 // pred_fallthru
      _
    // Predicated region
    $region34: #{tpu_custom_call.1} parent=1 // pred_check
      _
    $region35: #{tpu_custom_call.1} parent=1 // pred_check_branch
      %38 = sbr.rel (0) target = $region37
    $region36: #{tpu_custom_call.1} parent=1 // pred_region
      _
    $region37: #{tpu_custom_call.1} parent=1 // pred_fallthru
      _
    // Predicated region
    $region38: #{tpu_custom_call.1} parent=1 // pred_check
      _
    $region39: #{tpu_custom_call.1} parent=1 // pred_check_branch
      %40 = sbr.rel (0) target = $region41
    $region40: #{tpu_custom_call.1} parent=1 // pred_region
      %s42 = ssub.s32 16384, 16384
      %43 = vsyncadd [#allocation3], %s42
      %s44 = sshll.u32 [#allocation2], 4
      %s45 = int_to_ptr.vmem [resolvable:$true] %s44
      %50 = dma.hbm_to_vmem [thread:$0]  %s9, 16384, %s45, [#allocation3], 1024, 1024, 64
    $region41: #{tpu_custom_call.1} parent=1 // pred_fallthru
      _
    // Predicated region
    $region42: #{tpu_custom_call.1} parent=1 // pred_check
      _
    $region43: #{tpu_custom_call.1} parent=1 // pred_check_branch
      %52 = sbr.rel (0) target = $region45
    $region44: #{tpu_custom_call.1} parent=1 // pred_region
      _
    $region45: #{tpu_custom_call.1} parent=1 // pred_fallthru
      _
    // Predicated region
    $region46: #{tpu_custom_call.1} parent=1 // pred_check
      _
    $region47: #{tpu_custom_call.1} parent=1 // pred_check_branch
      %54 = sbr.rel (0) target = $region49
    $region48: #{tpu_custom_call.1} parent=1 // pred_region
      %s56 = ssub.s32 16384, 16384
      %57 = vsyncadd [#allocation6], %s56
      %s58 = sshll.u32 [#allocation5], 4
      %s59 = int_to_ptr.vmem [resolvable:$true] %s58
      %64 = dma.hbm_to_vmem [thread:$0]  %s11, 16384, %s59, [#allocation6], 128, 128, 8
    $region49: #{tpu_custom_call.1} parent=1 // pred_fallthru
      _
    // Predicated region
    $region50: #{tpu_custom_call.1} parent=1 // pred_check
      _
    $region51: #{tpu_custom_call.1} parent=1 // pred_check_branch
      %66 = sbr.rel (0) target = $region53
    $region52: #{tpu_custom_call.1} parent=1 // pred_region
      _
    $region53: #{tpu_custom_call.1} parent=1 // pred_fallthru
      _
    // Predicated region
    $region54: #{tpu_custom_call.1} parent=1 // pred_check
      _
    $region55: #{tpu_custom_call.1} parent=1 // pred_check_branch
      %68 = sbr.rel (0) target = $region57
    $region56: #{tpu_custom_call.1} parent=1 // pred_region
      %69 = dma.done [#allocation3], 16384
    $region57: #{tpu_custom_call.1} parent=1 // pred_fallthru
      _
    // Predicated region
    $region58: #{tpu_custom_call.1} parent=1 // pred_check
      _
    $region59: #{tpu_custom_call.1} parent=1 // pred_check_branch
      %71 = sbr.rel (0) target = $region61
    $region60: #{tpu_custom_call.1} parent=1 // pred_region
      %72 = dma.done [#allocation6], 16384
    $region61: #{tpu_custom_call.1} parent=1 // pred_fallthru
      _
    %v73 = vld [vmem:[%s0] sm:$0xff]
    %v74 = vld [vmem:[%s0 + $0x8] sm:$0xff]
    %v75 = vld [vmem:[%s0 + $0x10] sm:$0xff]
    %v76 = vld [vmem:[%s0 + $0x18] sm:$0xff]
    %vm81 = vcmask 1041408
    %v82 = vrot.slane %v73, 6
    %v83 = vrot.slane %v74, 6
    %v84 = vsel %vm81, %v82, %v83
    %v85 = vrot.slane %v75, 6
    %v86 = vrot.slane %v76, 6
    %v87 = vsel %vm81, %v85, %v86
    %v94 = vsel %vm81, 0.0, %v82
    %v95 = vsel %vm81, 0.0, %v85
    %v96 = vsel %vm81, %v83, 0.0
    %v97 = vsel %vm81, %v86, 0.0
    %vm102 = vcmask 1046528
    %v103 = vrot.slane %v94, 1
    %v104 = vrot.slane %v84, 1
    %v105 = vsel %vm102, %v103, %v104
    %v106 = vrot.slane %v96, 1
    %v107 = vsel %vm102, %v104, %v106
    %v108 = vrot.slane %v95, 1
    %v109 = vrot.slane %v87, 1
    %v110 = vsel %vm102, %v108, %v109
    %v111 = vrot.slane %v97, 1
    %v112 = vsel %vm102, %v109, %v111
    %113 = vrot.lane.b32.xlu0 %v105, 4
    %v114 = vpop.permute.xlu0 %113
    %115 = vrot.lane.b32.xlu0 %v107, 4
    %v116 = vpop.permute.xlu0 %115
    %117 = vrot.lane.b32.xlu0 %v110, 4
    %v118 = vpop.permute.xlu0 %117
    %119 = vrot.lane.b32.xlu0 %v112, 4
    %v120 = vpop.permute.xlu0 %119
    %vm125 = vcmask 1045504
    %v126 = vrot.slane %v94, 2
    %v127 = vrot.slane %v84, 2
    %v128 = vsel %vm125, %v126, %v127
    %v129 = vrot.slane %v96, 2
    %v130 = vsel %vm125, %v127, %v129
    %v131 = vrot.slane %v95, 2
    %v132 = vrot.slane %v87, 2
    %v133 = vsel %vm125, %v131, %v132
    %v134 = vrot.slane %v97, 2
    %v135 = vsel %vm125, %v132, %v134
    %136 = vrot.lane.b32.xlu0 %v128, 8
    %v137 = vpop.permute.xlu0 %136
    %138 = vrot.lane.b32.xlu0 %v130, 8
    %v139 = vpop.permute.xlu0 %138
    %140 = vrot.lane.b32.xlu0 %v133, 8
    %v141 = vpop.permute.xlu0 %140
    %142 = vrot.lane.b32.xlu0 %v135, 8
    %v143 = vpop.permute.xlu0 %142
    %vm148 = vcmask 1044480
    %v149 = vrot.slane %v94, 3
    %v150 = vrot.slane %v84, 3
    %v151 = vsel %vm148, %v149, %v150
    %v152 = vrot.slane %v96, 3
    %v153 = vsel %vm148, %v150, %v152
    %v154 = vrot.slane %v95, 3
    %v155 = vrot.slane %v87, 3
    %v156 = vsel %vm148, %v154, %v155
    %v157 = vrot.slane %v97, 3
    %v158 = vsel %vm148, %v155, %v157
    %159 = vrot.lane.b32.xlu0 %v151, 12
    %v160 = vpop.permute.xlu0 %159
    %161 = vrot.lane.b32.xlu0 %v153, 12
    %v162 = vpop.permute.xlu0 %161
    %163 = vrot.lane.b32.xlu0 %v156, 12
    %v164 = vpop.permute.xlu0 %163
    %165 = vrot.lane.b32.xlu0 %v158, 12
    %v166 = vpop.permute.xlu0 %165
    %vm171 = vcmask 1043456
    %v172 = vrot.slane %v94, 4
    %v173 = vrot.slane %v84, 4
    %v174 = vsel %vm171, %v172, %v173
    %v175 = vrot.slane %v96, 4
    %v176 = vsel %vm171, %v173, %v175
    %v177 = vrot.slane %v95, 4
    %v178 = vrot.slane %v87, 4
    %v179 = vsel %vm171, %v177, %v178
    %v180 = vrot.slane %v97, 4
    %v181 = vsel %vm171, %v178, %v180
    %182 = vrot.lane.b32.xlu0 %v174, 16
    %v183 = vpop.permute.xlu0 %182
    %184 = vrot.lane.b32.xlu0 %v176, 16
    %v185 = vpop.permute.xlu0 %184
    %186 = vrot.lane.b32.xlu0 %v179, 16
    %v187 = vpop.permute.xlu0 %186
    %188 = vrot.lane.b32.xlu0 %v181, 16
    %v189 = vpop.permute.xlu0 %188
    %vm194 = vcmask 31744
    %v195 = vsel %vm194, %v94, %v114
    %v196 = vsel %vm194, %v84, %v116
    %v197 = vsel %vm194, %v95, %v118
    %v198 = vsel %vm194, %v87, %v120
    %vm199 = vcmask 64512
    %v200 = vsel %vm199, %v195, %v137
    %v201 = vsel %vm199, %v196, %v139
    %v202 = vsel %vm199, %v197, %v141
    %v203 = vsel %vm199, %v198, %v143
    %vm204 = vcmask 97280
    %v205 = vsel %vm204, %v200, %v160
    %v206 = vsel %vm204, %v201, %v162
    %v207 = vsel %vm204, %v202, %v164
    %v208 = vsel %vm204, %v203, %v166
    %vm209 = vcmask 130048
    %v210 = vsel %vm209, %v205, %v183
    %v211 = vsel %vm209, %v206, %v185
    %v212 = vsel %vm209, %v207, %v187
    %v213 = vsel %vm209, %v208, %v189
    %v214 = vld [vmem:[%s1] sm:$0xff]
    %v215 = vld [vmem:[%s1 + $0x8] sm:$0xff]
    %v216 = vld [vmem:[%s1 + $0x10] sm:$0xf]
    %v217 = vld [vmem:[%s2] sm:$0x1]
    %v219 = vlaneseq
    %v220 = vshrl.u32 %v219, 7
    %v221 = vsub.s32 0, %v220
    %v222 = vrot.slane %v217, %v221
    %vm224 = vcmask 162816
    %v226 = vsel %vm224, %v210, 0
    %v229 = vsel %vm224, %v211, 0
    %v232 = vsel %vm224, %v212, 0
    %v235 = vsel %vm224, %v213, 0
    %v238 = vsel %vm171, %v216, 0
    %240 = vmatprep.subr.mxu0 0.0
    %241 = vmatpush1.msra.mxu0 0.0
    %242 = vmatprep.subr.mxu0 0.0
    %243 = vmatpush1.msra.mxu0 0.0
    %244 = vmatprep.subr.mxu0 0.0
    %245 = vmatpush1.msra.mxu0 0.0
    %246 = vmatprep.subr.mxu0 0.0
    %247 = vmatpush1.msra.mxu0 0.0
    %248 = vmatprep.subr.mxu0 0.0
    %249 = vmatpush1.msra.mxu0 0.0
    %250 = vmatprep.subr.mxu0 0.0
    %251 = vmatpush1.msra.mxu0 0.0
    %252 = vmatprep.subr.mxu0 0.0
    %253 = vmatpush1.msra.mxu0 0.0
    %254 = vmatprep.subr.mxu0 0.0
    %255 = vmatpush1.msra.mxu0 0.0
    %256 = vmatprep.subr.mxu0 0.0
    %257 = vmatpush1.msra.mxu0 0.0
    %258 = vmatprep.subr.mxu0 0.0
    %259 = vmatpush1.msra.mxu0 0.0
    %260 = vmatprep.subr.mxu0 0.0
    %261 = vmatpush1.msra.mxu0 0.0
    %262 = vmatprep.subr.mxu0 0.0
    %263 = vmatpush1.msra.mxu0 0.0
    %264 = vmatprep.subr.mxu0 0.0
    %265 = vmatpush1.msra.mxu0 0.0
    %266 = vmatprep.subr.mxu0 0.0
    %267 = vmatpush1.msra.mxu0 %v238
    %268 = vmatprep.subr.mxu0 0.0
    %269 = vmatpush1.msra.mxu0 %v215
    %270 = vmatprep.subr.mxu0 0.0
    %271 = vmatpush1.msra.mxu0 %v214
    %272 = vmatprep.subr.mxu0 0.0
    %273 = vmatpush2.msra.mxu0 0.0
    %274 = vmatprep.subr.mxu0 0.0
    %275 = vmatpush2.msra.mxu0 0.0
    %276 = vmatprep.subr.mxu0 0.0
    %277 = vmatpush2.msra.mxu0 0.0
    %278 = vmatprep.subr.mxu0 0.0
    %279 = vmatpush2.msra.mxu0 0.0
    %280 = vmatprep.subr.mxu0 0.0
    %281 = vmatpush2.msra.mxu0 0.0
    %282 = vmatprep.subr.mxu0 0.0
    %283 = vmatpush2.msra.mxu0 0.0
    %284 = vmatprep.subr.mxu0 0.0
    %285 = vmatpush2.msra.mxu0 0.0
    %286 = vmatprep.subr.mxu0 0.0
    %287 = vmatpush2.msra.mxu0 0.0
    %288 = vmatprep.subr.mxu0 0.0
    %289 = vmatpush2.msra.mxu0 0.0
    %290 = vmatprep.subr.mxu0 0.0
    %291 = vmatpush2.msra.mxu0 0.0
    %292 = vmatprep.subr.mxu0 0.0
    %293 = vmatpush2.msra.mxu0 0.0
    %294 = vmatprep.subr.mxu0 0.0
    %295 = vmatpush2.msra.mxu0 0.0
    %296 = vmatprep.subr.mxu0 0.0
    %297 = vmatpush2.msra.mxu0 0.0
    %298 = vmatprep.subr.mxu0 0.0
    %299 = vmatpush2.msra.mxu0 0.0
    %300 = vmatprep.subr.mxu0 0.0
    %301 = vmatpush2.msra.mxu0 0.0
    %302 = vmatprep.subr.mxu0 0.0
    %303 = vmatpush2.msra.mxu0 0.0
    %304 = vmatprep.mubr.f32.mxu0 0.0
    %305 = vmatmul.mubr.f32.gmra.mxu0 %v226
    %v306 = vpop.f32.mrf.mxu0
    %v307 = vadd.f32 %v222, %v306
    %v308 = vpop.f32.mrf.mxu0
    %309 = vmatprep.mubr.f32.mxu0 0.0
    %310 = vmatmul.mubr.f32.gmra.mxu0 %v229
    %v311 = vpop.f32.mrf.mxu0
    %v312 = vadd.f32 %v222, %v311
    %v313 = vpop.f32.mrf.mxu0
    %314 = vmatprep.mubr.f32.mxu0 0.0
    %315 = vmatmul.mubr.f32.gmra.mxu0 %v232
    %v316 = vpop.f32.mrf.mxu0
    %v317 = vadd.f32 %v222, %v316
    %v318 = vpop.f32.mrf.mxu0
    %319 = vmatprep.mubr.f32.mxu0 0.0
    %320 = vmatmul.mubr.f32.gmra.mxu0 %v235
    %v321 = vpop.f32.mrf.mxu0
    %v322 = vadd.f32 %v222, %v321
    %v323 = vpop.f32.mrf.mxu0
    %324 = vdwg.mxu0
    %v325 = vmax.f32 %v307, 0.0
    %v326 = vmax.f32 %v312, 0.0
    %v327 = vmax.f32 %v317, 0.0
    %v328 = vmax.f32 %v322, 0.0
    %vm333 = vcmask 1040384
    %v334 = vrot.slane %v325, 7
    %v335 = vrot.slane %v326, 7
    %v336 = vsel %vm333, %v334, %v335
    %v337 = vrot.slane %v327, 7
    %v338 = vrot.slane %v328, 7
    %v339 = vsel %vm333, %v337, %v338
    %v346 = vsel %vm333, 0.0, %v334
    %v347 = vsel %vm333, 0.0, %v337
    %v348 = vsel %vm333, %v335, 0.0
    %v349 = vsel %vm333, %v338, 0.0
    %v354 = vrot.slane %v346, 1
    %v355 = vrot.slane %v336, 1
    %v356 = vsel %vm102, %v354, %v355
    %v357 = vrot.slane %v348, 1
    %v358 = vsel %vm102, %v355, %v357
    %v359 = vrot.slane %v347, 1
    %v360 = vrot.slane %v339, 1
    %v361 = vsel %vm102, %v359, %v360
    %v362 = vrot.slane %v349, 1
    %v363 = vsel %vm102, %v360, %v362
    %364 = vrot.lane.b32.xlu0 %v356, 32
    %v365 = vpop.permute.xlu0 %364
    %366 = vrot.lane.b32.xlu0 %v358, 32
    %v367 = vpop.permute.xlu0 %366
    %368 = vrot.lane.b32.xlu0 %v361, 32
    %v369 = vpop.permute.xlu0 %368
    %370 = vrot.lane.b32.xlu0 %v363, 32
    %v371 = vpop.permute.xlu0 %370
    %v376 = vrot.slane %v346, 2
    %v377 = vrot.slane %v336, 2
    %v378 = vsel %vm125, %v376, %v377
    %v379 = vrot.slane %v348, 2
    %v380 = vsel %vm125, %v377, %v379
    %v381 = vrot.slane %v347, 2
    %v382 = vrot.slane %v339, 2
    %v383 = vsel %vm125, %v381, %v382
    %v384 = vrot.slane %v349, 2
    %v385 = vsel %vm125, %v382, %v384
    %386 = vrot.lane.b32.xlu0 %v378, 64
    %v387 = vpop.permute.xlu0 %386
    %388 = vrot.lane.b32.xlu0 %v380, 64
    %v389 = vpop.permute.xlu0 %388
    %390 = vrot.lane.b32.xlu0 %v383, 64
    %v391 = vpop.permute.xlu0 %390
    %392 = vrot.lane.b32.xlu0 %v385, 64
    %v393 = vpop.permute.xlu0 %392
    %vm398 = vcmask 261120
    %v399 = vsel %vm398, %v346, %v365
    %v400 = vsel %vm398, %v336, %v367
    %v401 = vsel %vm398, %v347, %v369
    %v402 = vsel %vm398, %v339, %v371
    %vm403 = vcmask 523264
    %v404 = vsel %vm403, %v399, %v387
    %v405 = vsel %vm403, %v400, %v389
    %v406 = vsel %vm403, %v401, %v391
    %v407 = vsel %vm403, %v402, %v393
    %v408 = vld [vmem:[%s3] sm:$0xff]
    %v409 = vld [vmem:[%s3 + $0x8] sm:$0xff]
    %v410 = vld [vmem:[%s3 + $0x10] sm:$0xff]
    %v411 = vld [vmem:[%s3 + $0x18] sm:$0xff]
    %v412 = vld [vmem:[%s3 + $0x20] sm:$0xff]
    %v413 = vld [vmem:[%s3 + $0x28] sm:$0xff]
    %v414 = vld [vmem:[%s3 + $0x30] sm:$0xff]
    %v415 = vld [vmem:[%s3 + $0x38] sm:$0xff]
    %v416 = vld [vmem:[%s3 + $0x40] sm:$0xff]
    %v417 = vld [vmem:[%s3 + $0x48] sm:$0xff]
    %v418 = vld [vmem:[%s3 + $0x50] sm:$0xff]
    %v419 = vld [vmem:[%s3 + $0x58] sm:$0xff]
    %v420 = vld [vmem:[%s4] sm:$0x1]
    %v422 = vlaneseq
    %v423 = vshrl.u32 %v422, 7
    %v424 = vsub.s32 0, %v423
    %v425 = vrot.slane %v420, %v424
    %vm427 = vcmask 785408
    %v429 = vsel %vm427, %v404, 0
    %v432 = vsel %vm427, %v405, 0
    %v435 = vsel %vm427, %v406, 0
    %v438 = vsel %vm427, %v407, 0
    %440 = vmatprep.subr.mxu0 0.0
    %441 = vmatpush1.msra.mxu0 0.0
    %442 = vmatprep.subr.mxu0 0.0
    %443 = vmatpush1.msra.mxu0 0.0
    %444 = vmatprep.subr.mxu0 0.0
    %445 = vmatpush1.msra.mxu0 0.0
    %446 = vmatprep.subr.mxu0 0.0
    %447 = vmatpush1.msra.mxu0 0.0
    %448 = vmatprep.subr.mxu0 0.0
    %449 = vmatpush1.msra.mxu0 %v419
    %450 = vmatprep.subr.mxu0 0.0
    %451 = vmatpush1.msra.mxu0 %v418
    %452 = vmatprep.subr.mxu0 0.0
    %453 = vmatpush1.msra.mxu0 %v417
    %454 = vmatprep.subr.mxu0 0.0
    %455 = vmatpush1.msra.mxu0 %v416
    %456 = vmatprep.subr.mxu0 0.0
    %457 = vmatpush1.msra.mxu0 %v415
    %458 = vmatprep.subr.mxu0 0.0
    %459 = vmatpush1.msra.mxu0 %v414
    %460 = vmatprep.subr.mxu0 0.0
    %461 = vmatpush1.msra.mxu0 %v413
    %462 = vmatprep.subr.mxu0 0.0
    %463 = vmatpush1.msra.mxu0 %v412
    %464 = vmatprep.subr.mxu0 0.0
    %465 = vmatpush1.msra.mxu0 %v411
    %466 = vmatprep.subr.mxu0 0.0
    %467 = vmatpush1.msra.mxu0 %v410
    %468 = vmatprep.subr.mxu0 0.0
    %469 = vmatpush1.msra.mxu0 %v409
    %470 = vmatprep.subr.mxu0 0.0
    %471 = vmatpush1.msra.mxu0 %v408
    %472 = vmatprep.subr.mxu0 0.0
    %473 = vmatpush2.msra.mxu0 0.0
    %474 = vmatprep.subr.mxu0 0.0
    %475 = vmatpush2.msra.mxu0 0.0
    %476 = vmatprep.subr.mxu0 0.0
    %477 = vmatpush2.msra.mxu0 0.0
    %478 = vmatprep.subr.mxu0 0.0
    %479 = vmatpush2.msra.mxu0 0.0
    %480 = vmatprep.subr.mxu0 0.0
    %481 = vmatpush2.msra.mxu0 0.0
    %482 = vmatprep.subr.mxu0 0.0
    %483 = vmatpush2.msra.mxu0 0.0
    %484 = vmatprep.subr.mxu0 0.0
    %485 = vmatpush2.msra.mxu0 0.0
    %486 = vmatprep.subr.mxu0 0.0
    %487 = vmatpush2.msra.mxu0 0.0
    %488 = vmatprep.subr.mxu0 0.0
    %489 = vmatpush2.msra.mxu0 0.0
    %490 = vmatprep.subr.mxu0 0.0
    %491 = vmatpush2.msra.mxu0 0.0
    %492 = vmatprep.subr.mxu0 0.0
    %493 = vmatpush2.msra.mxu0 0.0
    %494 = vmatprep.subr.mxu0 0.0
    %495 = vmatpush2.msra.mxu0 0.0
    %496 = vmatprep.subr.mxu0 0.0
    %497 = vmatpush2.msra.mxu0 0.0
    %498 = vmatprep.subr.mxu0 0.0
    %499 = vmatpush2.msra.mxu0 0.0
    %500 = vmatprep.subr.mxu0 0.0
    %501 = vmatpush2.msra.mxu0 0.0
    %502 = vmatprep.subr.mxu0 0.0
    %503 = vmatpush2.msra.mxu0 0.0
    %504 = vmatprep.mubr.f32.mxu0 0.0
    %505 = vmatmul.mubr.f32.gmra.mxu0 %v429
    %v506 = vpop.f32.mrf.mxu0
    %v507 = vadd.f32 %v425, %v506
    %v508 = vpop.f32.mrf.mxu0
    %509 = vmatprep.mubr.f32.mxu0 0.0
    %510 = vmatmul.mubr.f32.gmra.mxu0 %v432
    %v511 = vpop.f32.mrf.mxu0
    %v512 = vadd.f32 %v425, %v511
    %v513 = vpop.f32.mrf.mxu0
    %514 = vmatprep.mubr.f32.mxu0 0.0
    %515 = vmatmul.mubr.f32.gmra.mxu0 %v435
    %v516 = vpop.f32.mrf.mxu0
    %v517 = vadd.f32 %v425, %v516
    %v518 = vpop.f32.mrf.mxu0
    %519 = vmatprep.mubr.f32.mxu0 0.0
    %520 = vmatmul.mubr.f32.gmra.mxu0 %v438
    %v521 = vpop.f32.mrf.mxu0
    %v522 = vadd.f32 %v425, %v521
    %v523 = vpop.f32.mrf.mxu0
    %524 = vdwg.mxu0
    %v525 = vmax.f32 %v507, 0.0
    %v526 = vmax.f32 %v512, 0.0
    %v527 = vmax.f32 %v517, 0.0
    %v528 = vmax.f32 %v522, 0.0
    %v533 = vcombine.high %v525, %v525
    %v535 = vunpack.c.l.s4 1983009808
    %v536 = vunpack.c.0.s8 %v535
    %v537 = vlaneseq
    %v538 = vshrl.u32 %v537, 7
    %v539 = vsub.s32 %v536, %v538
    %v540 = vrot.slane %v525, %v539
    %v542 = vunpack.c.l.s4 1983009808
    %v543 = vunpack.c.0.s8 %v542
    %v544 = vlaneseq
    %v545 = vshrl.u32 %v544, 7
    %v546 = vsub.s32 %v543, %v545
    %v547 = vrot.slane %v533, %v546
    %v548 = vcombine.high %v540, %v540
    %v549 = vcombine.high %v547, %v547
    %v550 = vcombine.high %v526, %v526
    %v552 = vunpack.c.l.s4 1983009808
    %v553 = vunpack.c.0.s8 %v552
    %v554 = vlaneseq
    %v555 = vshrl.u32 %v554, 7
    %v556 = vsub.s32 %v553, %v555
    %v557 = vrot.slane %v526, %v556
    %v559 = vunpack.c.l.s4 1983009808
    %v560 = vunpack.c.0.s8 %v559
    %v561 = vlaneseq
    %v562 = vshrl.u32 %v561, 7
    %v563 = vsub.s32 %v560, %v562
    %v564 = vrot.slane %v550, %v563
    %v565 = vcombine.high %v557, %v557
    %v566 = vcombine.high %v564, %v564
    %v567 = vcombine.high %v527, %v527
    %v569 = vunpack.c.l.s4 1983009808
    %v570 = vunpack.c.0.s8 %v569
    %v571 = vlaneseq
    %v572 = vshrl.u32 %v571, 7
    %v573 = vsub.s32 %v570, %v572
    %v574 = vrot.slane %v527, %v573
    %v576 = vunpack.c.l.s4 1983009808
    %v577 = vunpack.c.0.s8 %v576
    %v578 = vlaneseq
    %v579 = vshrl.u32 %v578, 7
    %v580 = vsub.s32 %v577, %v579
    %v581 = vrot.slane %v567, %v580
    %v582 = vcombine.high %v574, %v574
    %v583 = vcombine.high %v581, %v581
    %v584 = vcombine.high %v528, %v528
    %v586 = vunpack.c.l.s4 1983009808
    %v587 = vunpack.c.0.s8 %v586
    %v588 = vlaneseq
    %v589 = vshrl.u32 %v588, 7
    %v590 = vsub.s32 %v587, %v589
    %v591 = vrot.slane %v528, %v590
    %v593 = vunpack.c.l.s4 1983009808
    %v594 = vunpack.c.0.s8 %v593
    %v595 = vlaneseq
    %v596 = vshrl.u32 %v595, 7
    %v597 = vsub.s32 %v594, %v596
    %v598 = vrot.slane %v584, %v597
    %v599 = vcombine.high %v591, %v591
    %v600 = vcombine.high %v598, %v598
    %vm617 = vcmask 254976
    %v618 = vsel %vm617, %v540, -inf
    %v619 = vrot.slane %v618, 4
    %v620 = vmax.f32 %v618, %v619
    %v621 = vrot.slane %v620, 2
    %v622 = vmax.f32 %v620, %v621
    %v623 = vrot.slane %v622, 1
    %v624 = vmax.f32 %v622, %v623
    %v625 = vsel %vm617, %v548, -inf
    %v626 = vrot.slane %v625, 4
    %v627 = vmax.f32 %v625, %v626
    %v628 = vrot.slane %v627, 2
    %v629 = vmax.f32 %v627, %v628
    %v630 = vrot.slane %v629, 1
    %v631 = vmax.f32 %v629, %v630
    %v632 = vsel %vm617, %v547, -inf
    %v633 = vrot.slane %v632, 4
    %v634 = vmax.f32 %v632, %v633
    %v635 = vrot.slane %v634, 2
    %v636 = vmax.f32 %v634, %v635
    %v637 = vrot.slane %v636, 1
    %v638 = vmax.f32 %v636, %v637
    %v639 = vsel %vm617, %v549, -inf
    %v640 = vrot.slane %v639, 4
    %v641 = vmax.f32 %v639, %v640
    %v642 = vrot.slane %v641, 2
    %v643 = vmax.f32 %v641, %v642
    %v644 = vrot.slane %v643, 1
    %v645 = vmax.f32 %v643, %v644
    %v646 = vsel %vm617, %v557, -inf
    %v647 = vrot.slane %v646, 4
    %v648 = vmax.f32 %v646, %v647
    %v649 = vrot.slane %v648, 2
    %v650 = vmax.f32 %v648, %v649
    %v651 = vrot.slane %v650, 1
    %v652 = vmax.f32 %v650, %v651
    %v653 = vsel %vm617, %v565, -inf
    %v654 = vrot.slane %v653, 4
    %v655 = vmax.f32 %v653, %v654
    %v656 = vrot.slane %v655, 2
    %v657 = vmax.f32 %v655, %v656
    %v658 = vrot.slane %v657, 1
    %v659 = vmax.f32 %v657, %v658
    %v660 = vsel %vm617, %v564, -inf
    %v661 = vrot.slane %v660, 4
    %v662 = vmax.f32 %v660, %v661
    %v663 = vrot.slane %v662, 2
    %v664 = vmax.f32 %v662, %v663
    %v665 = vrot.slane %v664, 1
    %v666 = vmax.f32 %v664, %v665
    %v667 = vsel %vm617, %v566, -inf
    %v668 = vrot.slane %v667, 4
    %v669 = vmax.f32 %v667, %v668
    %v670 = vrot.slane %v669, 2
    %v671 = vmax.f32 %v669, %v670
    %v672 = vrot.slane %v671, 1
    %v673 = vmax.f32 %v671, %v672
    %v674 = vsel %vm617, %v574, -inf
    %v675 = vrot.slane %v674, 4
    %v676 = vmax.f32 %v674, %v675
    %v677 = vrot.slane %v676, 2
    %v678 = vmax.f32 %v676, %v677
    %v679 = vrot.slane %v678, 1
    %v680 = vmax.f32 %v678, %v679
    %v681 = vsel %vm617, %v582, -inf
    %v682 = vrot.slane %v681, 4
    %v683 = vmax.f32 %v681, %v682
    %v684 = vrot.slane %v683, 2
    %v685 = vmax.f32 %v683, %v684
    %v686 = vrot.slane %v685, 1
    %v687 = vmax.f32 %v685, %v686
    %v688 = vsel %vm617, %v581, -inf
    %v689 = vrot.slane %v688, 4
    %v690 = vmax.f32 %v688, %v689
    %v691 = vrot.slane %v690, 2
    %v692 = vmax.f32 %v690, %v691
    %v693 = vrot.slane %v692, 1
    %v694 = vmax.f32 %v692, %v693
    %v695 = vsel %vm617, %v583, -inf
    %v696 = vrot.slane %v695, 4
    %v697 = vmax.f32 %v695, %v696
    %v698 = vrot.slane %v697, 2
    %v699 = vmax.f32 %v697, %v698
    %v700 = vrot.slane %v699, 1
    %v701 = vmax.f32 %v699, %v700
    %v702 = vsel %vm617, %v591, -inf
    %v703 = vrot.slane %v702, 4
    %v704 = vmax.f32 %v702, %v703
    %v705 = vrot.slane %v704, 2
    %v706 = vmax.f32 %v704, %v705
    %v707 = vrot.slane %v706, 1
    %v708 = vmax.f32 %v706, %v707
    %v709 = vsel %vm617, %v599, -inf
    %v710 = vrot.slane %v709, 4
    %v711 = vmax.f32 %v709, %v710
    %v712 = vrot.slane %v711, 2
    %v713 = vmax.f32 %v711, %v712
    %v714 = vrot.slane %v713, 1
    %v715 = vmax.f32 %v713, %v714
    %v716 = vsel %vm617, %v598, -inf
    %v717 = vrot.slane %v716, 4
    %v718 = vmax.f32 %v716, %v717
    %v719 = vrot.slane %v718, 2
    %v720 = vmax.f32 %v718, %v719
    %v721 = vrot.slane %v720, 1
    %v722 = vmax.f32 %v720, %v721
    %v723 = vsel %vm617, %v600, -inf
    %v724 = vrot.slane %v723, 4
    %v725 = vmax.f32 %v723, %v724
    %v726 = vrot.slane %v725, 2
    %v727 = vmax.f32 %v725, %v726
    %v728 = vrot.slane %v727, 1
    %v729 = vmax.f32 %v727, %v728
    %vm746 = vcmask 1042434
    %v747 = vsel %vm746, %v631, %v624
    %vm748 = vcmask 1043459
    %v749 = vsel %vm748, %v638, %v747
    %vm750 = vcmask 1044484
    %v751 = vsel %vm750, %v645, %v749
    %vm752 = vcmask 1045509
    %v753 = vsel %vm752, %v652, %v751
    %vm754 = vcmask 1046534
    %v755 = vsel %vm754, %v659, %v753
    %vm756 = vcmask 1047559
    %v757 = vsel %vm756, %v666, %v755
    %v758 = vsel %vm746, %v687, %v680
    %v759 = vsel %vm748, %v694, %v758
    %v760 = vsel %vm750, %v701, %v759
    %v761 = vsel %vm752, %v708, %v760
    %v762 = vsel %vm754, %v715, %v761
    %v763 = vsel %vm756, %v722, %v762
    %v768 = vsel %vm333, 0.0, %v757
    %v769 = vsel %vm333, 0.0, %v763
    %v770 = vsel %vm333, %v673, 0.0
    %v771 = vsel %vm333, %v729, 0.0
    %v776 = vrot.slane %v768, 1
    %v777 = vrot.slane %v770, 1
    %v778 = vsel %vm102, %v776, %v777
    %v779 = vrot.slane %v769, 1
    %v780 = vrot.slane %v771, 1
    %v781 = vsel %vm102, %v779, %v780
    %782 = vrot.lane.b32.xlu0 %v778, 32
    %v783 = vpop.permute.xlu0 %782
    %784 = vrot.lane.b32.xlu0 %v781, 32
    %v785 = vpop.permute.xlu0 %784
    %v788 = vrot.slane %v768, 2
    %v789 = vrot.slane %v770, 2
    %v790 = vsel %vm125, %v788, %v789
    %v791 = vrot.slane %v769, 2
    %v792 = vrot.slane %v771, 2
    %v793 = vsel %vm125, %v791, %v792
    %794 = vrot.lane.b32.xlu0 %v790, 64
    %v795 = vpop.permute.xlu0 %794
    %796 = vrot.lane.b32.xlu0 %v793, 64
    %v797 = vpop.permute.xlu0 %796
    %v800 = vsel %vm398, %v768, %v783
    %v801 = vsel %vm398, %v769, %v785
    %v802 = vsel %vm403, %v800, %v795
    %v803 = vsel %vm403, %v801, %v797
    %v804 = vld [vmem:[%s5] sm:$0xff]
    %v805 = vld [vmem:[%s5 + $0x8] sm:$0xff]
    %v806 = vld [vmem:[%s5 + $0x10] sm:$0xff]
    %v807 = vld [vmem:[%s5 + $0x18] sm:$0xff]
    %v808 = vld [vmem:[%s5 + $0x20] sm:$0xff]
    %v809 = vld [vmem:[%s5 + $0x28] sm:$0xff]
    %v810 = vld [vmem:[%s5 + $0x30] sm:$0xff]
    %v811 = vld [vmem:[%s5 + $0x38] sm:$0xff]
    %v812 = vld [vmem:[%s5 + $0x40] sm:$0xff]
    %v813 = vld [vmem:[%s5 + $0x48] sm:$0xff]
    %v814 = vld [vmem:[%s5 + $0x50] sm:$0xff]
    %v815 = vld [vmem:[%s5 + $0x58] sm:$0xff]
    %v816 = vld [vmem:[%s6] sm:$0x1]
    %v818 = vlaneseq
    %v819 = vshrl.u32 %v818, 7
    %v820 = vsub.s32 0, %v819
    %v821 = vrot.slane %v816, %v820
    %v824 = vsel %vm427, %v802, 0
    %v827 = vsel %vm427, %v803, 0
    %829 = vmatprep.subr.mxu0 0.0
    %830 = vmatpush1.msra.mxu0 0.0
    %831 = vmatprep.subr.mxu0 0.0
    %832 = vmatpush1.msra.mxu0 0.0
    %833 = vmatprep.subr.mxu0 0.0
    %834 = vmatpush1.msra.mxu0 0.0
    %835 = vmatprep.subr.mxu0 0.0
    %836 = vmatpush1.msra.mxu0 0.0
    %837 = vmatprep.subr.mxu0 0.0
    %838 = vmatpush1.msra.mxu0 %v815
    %839 = vmatprep.subr.mxu0 0.0
    %840 = vmatpush1.msra.mxu0 %v814
    %841 = vmatprep.subr.mxu0 0.0
    %842 = vmatpush1.msra.mxu0 %v813
    %843 = vmatprep.subr.mxu0 0.0
    %844 = vmatpush1.msra.mxu0 %v812
    %845 = vmatprep.subr.mxu0 0.0
    %846 = vmatpush1.msra.mxu0 %v811
    %847 = vmatprep.subr.mxu0 0.0
    %848 = vmatpush1.msra.mxu0 %v810
    %849 = vmatprep.subr.mxu0 0.0
    %850 = vmatpush1.msra.mxu0 %v809
    %851 = vmatprep.subr.mxu0 0.0
    %852 = vmatpush1.msra.mxu0 %v808
    %853 = vmatprep.subr.mxu0 0.0
    %854 = vmatpush1.msra.mxu0 %v807
    %855 = vmatprep.subr.mxu0 0.0
    %856 = vmatpush1.msra.mxu0 %v806
    %857 = vmatprep.subr.mxu0 0.0
    %858 = vmatpush1.msra.mxu0 %v805
    %859 = vmatprep.subr.mxu0 0.0
    %860 = vmatpush1.msra.mxu0 %v804
    %861 = vmatprep.subr.mxu0 0.0
    %862 = vmatpush2.msra.mxu0 0.0
    %863 = vmatprep.subr.mxu0 0.0
    %864 = vmatpush2.msra.mxu0 0.0
    %865 = vmatprep.subr.mxu0 0.0
    %866 = vmatpush2.msra.mxu0 0.0
    %867 = vmatprep.subr.mxu0 0.0
    %868 = vmatpush2.msra.mxu0 0.0
    %869 = vmatprep.subr.mxu0 0.0
    %870 = vmatpush2.msra.mxu0 0.0
    %871 = vmatprep.subr.mxu0 0.0
    %872 = vmatpush2.msra.mxu0 0.0
    %873 = vmatprep.subr.mxu0 0.0
    %874 = vmatpush2.msra.mxu0 0.0
    %875 = vmatprep.subr.mxu0 0.0
    %876 = vmatpush2.msra.mxu0 0.0
    %877 = vmatprep.subr.mxu0 0.0
    %878 = vmatpush2.msra.mxu0 0.0
    %879 = vmatprep.subr.mxu0 0.0
    %880 = vmatpush2.msra.mxu0 0.0
    %881 = vmatprep.subr.mxu0 0.0
    %882 = vmatpush2.msra.mxu0 0.0
    %883 = vmatprep.subr.mxu0 0.0
    %884 = vmatpush2.msra.mxu0 0.0
    %885 = vmatprep.subr.mxu0 0.0
    %886 = vmatpush2.msra.mxu0 0.0
    %887 = vmatprep.subr.mxu0 0.0
    %888 = vmatpush2.msra.mxu0 0.0
    %889 = vmatprep.subr.mxu0 0.0
    %890 = vmatpush2.msra.mxu0 0.0
    %891 = vmatprep.subr.mxu0 0.0
    %892 = vmatpush2.msra.mxu0 0.0
    %893 = vmatprep.mubr.f32.mxu0 0.0
    %894 = vmatmul.mubr.f32.gmra.mxu0 %v824
    %v895 = vpop.f32.mrf.mxu0
    %v896 = vadd.f32 %v821, %v895
    %v897 = vpop.f32.mrf.mxu0
    %898 = vmatprep.mubr.f32.mxu0 0.0
    %899 = vmatmul.mubr.f32.gmra.mxu0 %v827
    %v900 = vpop.f32.mrf.mxu0
    %v901 = vadd.f32 %v821, %v900
    %v902 = vpop.f32.mrf.mxu0
    %903 = vdwg.mxu0
    %v904 = vmax.f32 %v896, 0.0
    %v905 = vmax.f32 %v901, 0.0
    %v908 = vcombine.high %v904, %v904
    %v910 = vunpack.c.l.s4 1983009808
    %v911 = vunpack.c.0.s8 %v910
    %v912 = vlaneseq
    %v913 = vshrl.u32 %v912, 7
    %v914 = vsub.s32 %v911, %v913
    %v915 = vrot.slane %v904, %v914
    %v917 = vunpack.c.l.s4 1983009808
    %v918 = vunpack.c.0.s8 %v917
    %v919 = vlaneseq
    %v920 = vshrl.u32 %v919, 7
    %v921 = vsub.s32 %v918, %v920
    %v922 = vrot.slane %v908, %v921
    %v923 = vcombine.high %v915, %v915
    %v924 = vcombine.high %v922, %v922
    %v925 = vcombine.high %v905, %v905
    %v927 = vunpack.c.l.s4 1983009808
    %v928 = vunpack.c.0.s8 %v927
    %v929 = vlaneseq
    %v930 = vshrl.u32 %v929, 7
    %v931 = vsub.s32 %v928, %v930
    %v932 = vrot.slane %v905, %v931
    %v934 = vunpack.c.l.s4 1983009808
    %v935 = vunpack.c.0.s8 %v934
    %v936 = vlaneseq
    %v937 = vshrl.u32 %v936, 7
    %v938 = vsub.s32 %v935, %v937
    %v939 = vrot.slane %v925, %v938
    %v940 = vcombine.high %v932, %v932
    %v941 = vcombine.high %v939, %v939
    %vm950 = vcmask 517120
    %v951 = vsel %vm950, %v915, -inf
    %v952 = vrot.slane %v951, 4
    %v953 = vmax.f32 %v951, %v952
    %v954 = vrot.slane %v953, 2
    %v955 = vmax.f32 %v953, %v954
    %v956 = vrot.slane %v955, 1
    %v957 = vmax.f32 %v955, %v956
    %v958 = vsel %vm950, %v923, -inf
    %v959 = vrot.slane %v958, 4
    %v960 = vmax.f32 %v958, %v959
    %v961 = vrot.slane %v960, 2
    %v962 = vmax.f32 %v960, %v961
    %v963 = vrot.slane %v962, 1
    %v964 = vmax.f32 %v962, %v963
    %v965 = vsel %vm950, %v922, -inf
    %v966 = vrot.slane %v965, 4
    %v967 = vmax.f32 %v965, %v966
    %v968 = vrot.slane %v967, 2
    %v969 = vmax.f32 %v967, %v968
    %v970 = vrot.slane %v969, 1
    %v971 = vmax.f32 %v969, %v970
    %v972 = vsel %vm950, %v924, -inf
    %v973 = vrot.slane %v972, 4
    %v974 = vmax.f32 %v972, %v973
    %v975 = vrot.slane %v974, 2
    %v976 = vmax.f32 %v974, %v975
    %v977 = vrot.slane %v976, 1
    %v978 = vmax.f32 %v976, %v977
    %v979 = vsel %vm950, %v932, -inf
    %v980 = vrot.slane %v979, 4
    %v981 = vmax.f32 %v979, %v980
    %v982 = vrot.slane %v981, 2
    %v983 = vmax.f32 %v981, %v982
    %v984 = vrot.slane %v983, 1
    %v985 = vmax.f32 %v983, %v984
    %v986 = vsel %vm950, %v940, -inf
    %v987 = vrot.slane %v986, 4
    %v988 = vmax.f32 %v986, %v987
    %v989 = vrot.slane %v988, 2
    %v990 = vmax.f32 %v988, %v989
    %v991 = vrot.slane %v990, 1
    %v992 = vmax.f32 %v990, %v991
    %v993 = vsel %vm950, %v939, -inf
    %v994 = vrot.slane %v993, 4
    %v995 = vmax.f32 %v993, %v994
    %v996 = vrot.slane %v995, 2
    %v997 = vmax.f32 %v995, %v996
    %v998 = vrot.slane %v997, 1
    %v999 = vmax.f32 %v997, %v998
    %v1000 = vsel %vm950, %v941, -inf
    %v1001 = vrot.slane %v1000, 4
    %v1002 = vmax.f32 %v1000, %v1001
    %v1003 = vrot.slane %v1002, 2
    %v1004 = vmax.f32 %v1002, %v1003
    %v1005 = vrot.slane %v1004, 1
    %v1006 = vmax.f32 %v1004, %v1005
    %v1015 = vsel %vm746, %v964, %v957
    %v1016 = vsel %vm748, %v971, %v1015
    %v1017 = vsel %vm750, %v978, %v1016
    %v1018 = vsel %vm746, %v992, %v985
    %v1019 = vsel %vm748, %v999, %v1018
    %v1020 = vsel %vm750, %v1006, %v1019
    %v1023 = vsel %vm333, 0.0, %v1017
    %v1024 = vsel %vm333, 0.0, %v1020
    %v1025 = vsel %vm148, %v1023, 0.0
    %v1026 = vsel %vm148, %v1024, 0.0
    %v1029 = vrot.slane %v1025, 1
    %v1030 = vrot.slane %v1026, 1
    %1031 = vrot.lane.b32.xlu0 %v1029, 64
    %v1032 = vpop.permute.xlu0 %1031
    %1033 = vrot.lane.b32.xlu0 %v1030, 64
    %v1034 = vpop.permute.xlu0 %1033
    %v1037 = vrot.slane %v1025, 2
    %v1038 = vrot.slane %v1026, 2
    %v1039 = vsel %vm403, %v1025, %v1032
    %v1040 = vsel %vm403, %v1026, %v1034
    %v1043 = vcombine.low %v1039, %v1037
    %v1044 = vcombine.low %v1040, %v1038
    %v1045 = vld [vmem:[%s7] sm:$0xff]
    %v1046 = vld [vmem:[%s7 + $0x8] sm:$0xff]
    %v1047 = vld [vmem:[%s7 + $0x10] sm:$0xff]
    %v1048 = vld [vmem:[%s7 + $0x18] sm:$0xff]
    %v1049 = vld [vmem:[%s7 + $0x20] sm:$0xff]
    %v1050 = vld [vmem:[%s7 + $0x28] sm:$0xff]
    %v1051 = vld [vmem:[%s7 + $0x30] sm:$0xff]
    %v1052 = vld [vmem:[%s7 + $0x38] sm:$0xff]
    %v1053 = vld [vmem:[%s7 + $0x40] sm:$0xff]
    %v1054 = vld [vmem:[%s7 + $0x48] sm:$0xff]
    %v1055 = vld [vmem:[%s7 + $0x50] sm:$0xff]
    %v1056 = vld [vmem:[%s7 + $0x58] sm:$0xff]
    %v1057 = vld [vmem:[%s7 + $0x60] sm:$0xff]
    %v1058 = vld [vmem:[%s7 + $0x68] sm:$0xff]
    %v1059 = vld [vmem:[%s7 + $0x70] sm:$0xff]
    %v1060 = vld [vmem:[%s7 + $0x78] sm:$0xff]
    %v1061 = vld [vmem:[%s7 + $0x80] sm:$0xff]
    %v1062 = vld [vmem:[%s7 + $0x88] sm:$0xff]
    %v1063 = vld [vmem:[%s7 + $0x90] sm:$0xff]
    %v1064 = vld [vmem:[%s7 + $0x98] sm:$0xff]
    %v1065 = vld [vmem:[%s7 + $0xa0] sm:$0xff]
    %v1066 = vld [vmem:[%s7 + $0xa8] sm:$0xff]
    %v1067 = vld [vmem:[%s7 + $0xb0] sm:$0xff]
    %v1068 = vld [vmem:[%s7 + $0xb8] sm:$0xff]
    %v1069 = vld [vmem:[%s8] sm:$0x1]
    %v1071 = vlaneseq
    %v1072 = vshrl.u32 %v1071, 7
    %v1073 = vsub.s32 0, %v1072
    %v1074 = vrot.slane %v1069, %v1073
    %v1076 = vcombine.low %v1043, %v1044
    %v1077 = vcombine.high %v1043, %v1044
    %v1079 = vsel %vm403, %v1077, 0
    %1081 = vmatprep.subr.mxu0 0.0
    %1082 = vmatpush1.msra.mxu0 %v1060
    %1083 = vmatprep.subr.mxu0 0.0
    %1084 = vmatpush1.msra.mxu0 %v1059
    %1085 = vmatprep.subr.mxu0 0.0
    %1086 = vmatpush1.msra.mxu0 %v1058
    %1087 = vmatprep.subr.mxu0 0.0
    %1088 = vmatpush1.msra.mxu0 %v1057
    %1089 = vmatprep.subr.mxu0 0.0
    %1090 = vmatpush1.msra.mxu0 %v1056
    %1091 = vmatprep.subr.mxu0 0.0
    %1092 = vmatpush1.msra.mxu0 %v1055
    %1093 = vmatprep.subr.mxu0 0.0
    %1094 = vmatpush1.msra.mxu0 %v1054
    %1095 = vmatprep.subr.mxu0 0.0
    %1096 = vmatpush1.msra.mxu0 %v1053
    %1097 = vmatprep.subr.mxu0 0.0
    %1098 = vmatpush1.msra.mxu0 %v1052
    %1099 = vmatprep.subr.mxu0 0.0
    %1100 = vmatpush1.msra.mxu0 %v1051
    %1101 = vmatprep.subr.mxu0 0.0
    %1102 = vmatpush1.msra.mxu0 %v1050
    %1103 = vmatprep.subr.mxu0 0.0
    %1104 = vmatpush1.msra.mxu0 %v1049
    %1105 = vmatprep.subr.mxu0 0.0
    %1106 = vmatpush1.msra.mxu0 %v1048
    %1107 = vmatprep.subr.mxu0 0.0
    %1108 = vmatpush1.msra.mxu0 %v1047
    %1109 = vmatprep.subr.mxu0 0.0
    %1110 = vmatpush1.msra.mxu0 %v1046
    %1111 = vmatprep.subr.mxu0 0.0
    %1112 = vmatpush1.msra.mxu0 %v1045
    %1113 = vmatprep.subr.mxu0 0.0
    %1114 = vmatpush2.msra.mxu0 0.0
    %1115 = vmatprep.subr.mxu0 0.0
    %1116 = vmatpush2.msra.mxu0 0.0
    %1117 = vmatprep.subr.mxu0 0.0
    %1118 = vmatpush2.msra.mxu0 0.0
    %1119 = vmatprep.subr.mxu0 0.0
    %1120 = vmatpush2.msra.mxu0 0.0
    %1121 = vmatprep.subr.mxu0 0.0
    %1122 = vmatpush2.msra.mxu0 0.0
    %1123 = vmatprep.subr.mxu0 0.0
    %1124 = vmatpush2.msra.mxu0 0.0
    %1125 = vmatprep.subr.mxu0 0.0
    %1126 = vmatpush2.msra.mxu0 0.0
    %1127 = vmatprep.subr.mxu0 0.0
    %1128 = vmatpush2.msra.mxu0 0.0
    %1129 = vmatprep.subr.mxu0 0.0
    %1130 = vmatpush2.msra.mxu0 %v1068
    %1131 = vmatprep.subr.mxu0 0.0
    %1132 = vmatpush2.msra.mxu0 %v1067
    %1133 = vmatprep.subr.mxu0 0.0
    %1134 = vmatpush2.msra.mxu0 %v1066
    %1135 = vmatprep.subr.mxu0 0.0
    %1136 = vmatpush2.msra.mxu0 %v1065
    %1137 = vmatprep.subr.mxu0 0.0
    %1138 = vmatpush2.msra.mxu0 %v1064
    %1139 = vmatprep.subr.mxu0 0.0
    %1140 = vmatpush2.msra.mxu0 %v1063
    %1141 = vmatprep.subr.mxu0 0.0
    %1142 = vmatpush2.msra.mxu0 %v1062
    %1143 = vmatprep.subr.mxu0 0.0
    %1144 = vmatpush2.msra.mxu0 %v1061
    %1145 = vmatprep.mubr.f32.mxu0 %v1079
    %1146 = vmatmul.mubr.f32.gmra.mxu0 %v1076
    %v1147 = vpop.f32.mrf.mxu0
    %v1148 = vadd.f32 %v1074, %v1147
    %v1149 = vpop.f32.mrf.mxu0
    %1150 = vdwg.mxu0
    %v1151 = vmax.f32 %v1148, 0.0
    %v1153 = vcombine.high %v1151, %v1151
    %v1155 = vsel %vm171, %v1151, 0.0
    %v1156 = vrot.slane %v1155, 4
    %v1157 = vadd.f32 %v1155, %v1156
    %v1158 = vrot.slane %v1157, 2
    %v1159 = vadd.f32 %v1157, %v1158
    %v1160 = vrot.slane %v1159, 1
    %v1161 = vadd.f32 %v1159, %v1160
    %v1162 = vsel %vm171, %v1153, 0.0
    %v1163 = vrot.slane %v1162, 4
    %v1164 = vadd.f32 %v1162, %v1163
    %v1165 = vrot.slane %v1164, 2
    %v1166 = vadd.f32 %v1164, %v1165
    %v1167 = vrot.slane %v1166, 1
    %v1168 = vadd.f32 %v1166, %v1167
    %v1169 = vrcp.pop 4.0
    %v1170 = vmul.f32 %v1161, %v1169
    %v1171 = vmul.f32 %v1168, %v1169
    %v1172 = vld [vmem:[#allocation2] sm:$0xff]
    %v1173 = vld [vmem:[#allocation2 + $0x8] sm:$0xff]
    %v1174 = vld [vmem:[#allocation2 + $0x10] sm:$0xff]
    %v1175 = vld [vmem:[#allocation2 + $0x18] sm:$0xff]
    %v1176 = vld [vmem:[#allocation2 + $0x20] sm:$0xff]
    %v1177 = vld [vmem:[#allocation2 + $0x28] sm:$0xff]
    %v1178 = vld [vmem:[#allocation2 + $0x30] sm:$0xff]
    %v1179 = vld [vmem:[#allocation2 + $0x38] sm:$0xff]
    %v1180 = vld [vmem:[#allocation2 + $0x40] sm:$0xff]
    %v1181 = vld [vmem:[#allocation2 + $0x48] sm:$0xff]
    %v1182 = vld [vmem:[#allocation2 + $0x50] sm:$0xff]
    %v1183 = vld [vmem:[#allocation2 + $0x58] sm:$0xff]
    %v1184 = vld [vmem:[#allocation2 + $0x60] sm:$0xff]
    %v1185 = vld [vmem:[#allocation2 + $0x68] sm:$0xff]
    %v1186 = vld [vmem:[#allocation2 + $0x70] sm:$0xff]
    %v1187 = vld [vmem:[#allocation2 + $0x78] sm:$0xff]
    %v1188 = vld [vmem:[#allocation2 + $0x80] sm:$0xff]
    %v1189 = vld [vmem:[#allocation2 + $0x88] sm:$0xff]
    %v1190 = vld [vmem:[#allocation2 + $0x90] sm:$0xff]
    %v1191 = vld [vmem:[#allocation2 + $0x98] sm:$0xff]
    %v1192 = vld [vmem:[#allocation2 + $0xa0] sm:$0xff]
    %v1193 = vld [vmem:[#allocation2 + $0xa8] sm:$0xff]
    %v1194 = vld [vmem:[#allocation2 + $0xb0] sm:$0xff]
    %v1195 = vld [vmem:[#allocation2 + $0xb8] sm:$0xff]
    %v1196 = vld [vmem:[#allocation2 + $0xc0] sm:$0xff]
    %v1197 = vld [vmem:[#allocation2 + $0xc8] sm:$0xff]
    %v1198 = vld [vmem:[#allocation2 + $0xd0] sm:$0xff]
    %v1199 = vld [vmem:[#allocation2 + $0xd8] sm:$0xff]
    %v1200 = vld [vmem:[#allocation2 + $0xe0] sm:$0xff]
    %v1201 = vld [vmem:[#allocation2 + $0xe8] sm:$0xff]
    %v1202 = vld [vmem:[#allocation2 + $0xf0] sm:$0xff]
    %v1203 = vld [vmem:[#allocation2 + $0xf8] sm:$0xff]
    %v1204 = vld [vmem:[#allocation2 + $0x100] sm:$0xff]
    %v1205 = vld [vmem:[#allocation2 + $0x108] sm:$0xff]
    %v1206 = vld [vmem:[#allocation2 + $0x110] sm:$0xff]
    %v1207 = vld [vmem:[#allocation2 + $0x118] sm:$0xff]
    %v1208 = vld [vmem:[#allocation2 + $0x120] sm:$0xff]
    %v1209 = vld [vmem:[#allocation2 + $0x128] sm:$0xff]
    %v1210 = vld [vmem:[#allocation2 + $0x130] sm:$0xff]
    %v1211 = vld [vmem:[#allocation2 + $0x138] sm:$0xff]
    %v1212 = vld [vmem:[#allocation2 + $0x140] sm:$0xff]
    %v1213 = vld [vmem:[#allocation2 + $0x148] sm:$0xff]
    %v1214 = vld [vmem:[#allocation2 + $0x150] sm:$0xff]
    %v1215 = vld [vmem:[#allocation2 + $0x158] sm:$0xff]
    %v1216 = vld [vmem:[#allocation2 + $0x160] sm:$0xff]
    %v1217 = vld [vmem:[#allocation2 + $0x168] sm:$0xff]
    %v1218 = vld [vmem:[#allocation2 + $0x170] sm:$0xff]
    %v1219 = vld [vmem:[#allocation2 + $0x178] sm:$0xff]
    %v1220 = vld [vmem:[#allocation2 + $0x180] sm:$0xff]
    %v1221 = vld [vmem:[#allocation2 + $0x188] sm:$0xff]
    %v1222 = vld [vmem:[#allocation2 + $0x190] sm:$0xff]
    %v1223 = vld [vmem:[#allocation2 + $0x198] sm:$0xff]
    %v1224 = vld [vmem:[#allocation2 + $0x1a0] sm:$0xff]
    %v1225 = vld [vmem:[#allocation2 + $0x1a8] sm:$0xff]
    %v1226 = vld [vmem:[#allocation2 + $0x1b0] sm:$0xff]
    %v1227 = vld [vmem:[#allocation2 + $0x1b8] sm:$0xff]
    %v1228 = vld [vmem:[#allocation2 + $0x1c0] sm:$0xff]
    %v1229 = vld [vmem:[#allocation2 + $0x1c8] sm:$0xff]
    %v1230 = vld [vmem:[#allocation2 + $0x1d0] sm:$0xff]
    %v1231 = vld [vmem:[#allocation2 + $0x1d8] sm:$0xff]
    %v1232 = vld [vmem:[#allocation2 + $0x1e0] sm:$0xff]
    %v1233 = vld [vmem:[#allocation2 + $0x1e8] sm:$0xff]
    %v1234 = vld [vmem:[#allocation2 + $0x1f0] sm:$0xff]
    %v1235 = vld [vmem:[#allocation2 + $0x1f8] sm:$0xff]
    %v1236 = vld [vmem:[#allocation2 + $0x200] sm:$0xff]
    %v1237 = vld [vmem:[#allocation2 + $0x208] sm:$0xff]
    %v1238 = vld [vmem:[#allocation2 + $0x210] sm:$0xff]
    %v1239 = vld [vmem:[#allocation2 + $0x218] sm:$0xff]
    %v1240 = vld [vmem:[#allocation2 + $0x220] sm:$0xff]
    %v1241 = vld [vmem:[#allocation2 + $0x228] sm:$0xff]
    %v1242 = vld [vmem:[#allocation2 + $0x230] sm:$0xff]
    %v1243 = vld [vmem:[#allocation2 + $0x238] sm:$0xff]
    %v1244 = vld [vmem:[#allocation2 + $0x240] sm:$0xff]
    %v1245 = vld [vmem:[#allocation2 + $0x248] sm:$0xff]
    %v1246 = vld [vmem:[#allocation2 + $0x250] sm:$0xff]
    %v1247 = vld [vmem:[#allocation2 + $0x258] sm:$0xff]
    %v1248 = vld [vmem:[#allocation2 + $0x260] sm:$0xff]
    %v1249 = vld [vmem:[#allocation2 + $0x268] sm:$0xff]
    %v1250 = vld [vmem:[#allocation2 + $0x270] sm:$0xff]
    %v1251 = vld [vmem:[#allocation2 + $0x278] sm:$0xff]
    %v1252 = vld [vmem:[#allocation2 + $0x280] sm:$0xff]
    %v1253 = vld [vmem:[#allocation2 + $0x288] sm:$0xff]
    %v1254 = vld [vmem:[#allocation2 + $0x290] sm:$0xff]
    %v1255 = vld [vmem:[#allocation2 + $0x298] sm:$0xff]
    %v1256 = vld [vmem:[#allocation2 + $0x2a0] sm:$0xff]
    %v1257 = vld [vmem:[#allocation2 + $0x2a8] sm:$0xff]
    %v1258 = vld [vmem:[#allocation2 + $0x2b0] sm:$0xff]
    %v1259 = vld [vmem:[#allocation2 + $0x2b8] sm:$0xff]
    %v1260 = vld [vmem:[#allocation2 + $0x2c0] sm:$0xff]
    %v1261 = vld [vmem:[#allocation2 + $0x2c8] sm:$0xff]
    %v1262 = vld [vmem:[#allocation2 + $0x2d0] sm:$0xff]
    %v1263 = vld [vmem:[#allocation2 + $0x2d8] sm:$0xff]
    %v1264 = vld [vmem:[#allocation2 + $0x2e0] sm:$0xff]
    %v1265 = vld [vmem:[#allocation2 + $0x2e8] sm:$0xff]
    %v1266 = vld [vmem:[#allocation2 + $0x2f0] sm:$0xff]
    %v1267 = vld [vmem:[#allocation2 + $0x2f8] sm:$0xff]
    %v1268 = vld [vmem:[#allocation2 + $0x300] sm:$0xff]
    %v1269 = vld [vmem:[#allocation2 + $0x308] sm:$0xff]
    %v1270 = vld [vmem:[#allocation2 + $0x310] sm:$0xff]
    %v1271 = vld [vmem:[#allocation2 + $0x318] sm:$0xff]
    %v1272 = vld [vmem:[#allocation2 + $0x320] sm:$0xff]
    %v1273 = vld [vmem:[#allocation2 + $0x328] sm:$0xff]
    %v1274 = vld [vmem:[#allocation2 + $0x330] sm:$0xff]
    %v1275 = vld [vmem:[#allocation2 + $0x338] sm:$0xff]
    %v1276 = vld [vmem:[#allocation2 + $0x340] sm:$0xff]
    %v1277 = vld [vmem:[#allocation2 + $0x348] sm:$0xff]
    %v1278 = vld [vmem:[#allocation2 + $0x350] sm:$0xff]
    %v1279 = vld [vmem:[#allocation2 + $0x358] sm:$0xff]
    %v1280 = vld [vmem:[#allocation2 + $0x360] sm:$0xff]
    %v1281 = vld [vmem:[#allocation2 + $0x368] sm:$0xff]
    %v1282 = vld [vmem:[#allocation2 + $0x370] sm:$0xff]
    %v1283 = vld [vmem:[#allocation2 + $0x378] sm:$0xff]
    %v1284 = vld [vmem:[#allocation2 + $0x380] sm:$0xff]
    %v1285 = vld [vmem:[#allocation2 + $0x388] sm:$0xff]
    %v1286 = vld [vmem:[#allocation2 + $0x390] sm:$0xff]
    %v1287 = vld [vmem:[#allocation2 + $0x398] sm:$0xff]
    %v1288 = vld [vmem:[#allocation2 + $0x3a0] sm:$0xff]
    %v1289 = vld [vmem:[#allocation2 + $0x3a8] sm:$0xff]
    %v1290 = vld [vmem:[#allocation2 + $0x3b0] sm:$0xff]
    %v1291 = vld [vmem:[#allocation2 + $0x3b8] sm:$0xff]
    %v1292 = vld [vmem:[#allocation2 + $0x3c0] sm:$0xff]
    %v1293 = vld [vmem:[#allocation2 + $0x3c8] sm:$0xff]
    %v1294 = vld [vmem:[#allocation2 + $0x3d0] sm:$0xff]
    %v1295 = vld [vmem:[#allocation2 + $0x3d8] sm:$0xff]
    %v1296 = vld [vmem:[#allocation2 + $0x3e0] sm:$0xff]
    %v1297 = vld [vmem:[#allocation2 + $0x3e8] sm:$0xff]
    %v1298 = vld [vmem:[#allocation2 + $0x3f0] sm:$0xff]
    %v1299 = vld [vmem:[#allocation2 + $0x3f8] sm:$0xff]
    %v1300 = vld [vmem:[%s10] sm:$0xff]
    %v1302 = vlaneseq
    %v1303 = vshrl.u32 %v1302, 7
    %v1304 = vsub.s32 0, %v1303
    %v1305 = vrot.slane %v1300, %v1304
    %v1306 = vlaneseq
    %v1307 = vshrl.u32 %v1306, 7
    %v1308 = vsub.s32 1, %v1307
    %v1309 = vrot.slane %v1300, %v1308
    %v1310 = vlaneseq
    %v1311 = vshrl.u32 %v1310, 7
    %v1312 = vsub.s32 2, %v1311
    %v1313 = vrot.slane %v1300, %v1312
    %v1314 = vlaneseq
    %v1315 = vshrl.u32 %v1314, 7
    %v1316 = vsub.s32 3, %v1315
    %v1317 = vrot.slane %v1300, %v1316
    %v1318 = vlaneseq
    %v1319 = vshrl.u32 %v1318, 7
    %v1320 = vsub.s32 4, %v1319
    %v1321 = vrot.slane %v1300, %v1320
    %v1322 = vlaneseq
    %v1323 = vshrl.u32 %v1322, 7
    %v1324 = vsub.s32 5, %v1323
    %v1325 = vrot.slane %v1300, %v1324
    %v1326 = vlaneseq
    %v1327 = vshrl.u32 %v1326, 7
    %v1328 = vsub.s32 6, %v1327
    %v1329 = vrot.slane %v1300, %v1328
    %v1330 = vlaneseq
    %v1331 = vshrl.u32 %v1330, 7
    %v1332 = vsub.s32 7, %v1331
    %v1333 = vrot.slane %v1300, %v1332
    %vm1344 = vcmask 1041409
    %v1345 = vsel %vm1344, %v1171, %v1170
    %1347 = vmatprep.subr.mxu0 %v1293
    %1348 = vmatpush1.msra.mxu0 %v1292
    %1349 = vmatprep.subr.mxu0 %v1285
    %1350 = vmatpush1.msra.mxu0 %v1284
    %1351 = vmatprep.subr.mxu0 %v1277
    %1352 = vmatpush1.msra.mxu0 %v1276
    %1353 = vmatprep.subr.mxu0 %v1269
    %1354 = vmatpush1.msra.mxu0 %v1268
    %1355 = vmatprep.subr.mxu0 %v1261
    %1356 = vmatpush1.msra.mxu0 %v1260
    %1357 = vmatprep.subr.mxu0 %v1253
    %1358 = vmatpush1.msra.mxu0 %v1252
    %1359 = vmatprep.subr.mxu0 %v1245
    %1360 = vmatpush1.msra.mxu0 %v1244
    %1361 = vmatprep.subr.mxu0 %v1237
    %1362 = vmatpush1.msra.mxu0 %v1236
    %1363 = vmatprep.subr.mxu0 %v1229
    %1364 = vmatpush1.msra.mxu0 %v1228
    %1365 = vmatprep.subr.mxu0 %v1221
    %1366 = vmatpush1.msra.mxu0 %v1220
    %1367 = vmatprep.subr.mxu0 %v1213
    %1368 = vmatpush1.msra.mxu0 %v1212
    %1369 = vmatprep.subr.mxu0 %v1205
    %1370 = vmatpush1.msra.mxu0 %v1204
    %1371 = vmatprep.subr.mxu0 %v1197
    %1372 = vmatpush1.msra.mxu0 %v1196
    %1373 = vmatprep.subr.mxu0 %v1189
    %1374 = vmatpush1.msra.mxu0 %v1188
    %1375 = vmatprep.subr.mxu0 %v1181
    %1376 = vmatpush1.msra.mxu0 %v1180
    %1377 = vmatprep.subr.mxu0 %v1173
    %1378 = vmatpush1.msra.mxu0 %v1172
    %1379 = vmatprep.subr.mxu0 0.0
    %1380 = vmatpush2.msra.mxu0 0.0
    %1381 = vmatprep.subr.mxu0 0.0
    %1382 = vmatpush2.msra.mxu0 0.0
    %1383 = vmatprep.subr.mxu0 0.0
    %1384 = vmatpush2.msra.mxu0 0.0
    %1385 = vmatprep.subr.mxu0 0.0
    %1386 = vmatpush2.msra.mxu0 0.0
    %1387 = vmatprep.subr.mxu0 0.0
    %1388 = vmatpush2.msra.mxu0 0.0
    %1389 = vmatprep.subr.mxu0 0.0
    %1390 = vmatpush2.msra.mxu0 0.0
    %1391 = vmatprep.subr.mxu0 0.0
    %1392 = vmatpush2.msra.mxu0 0.0
    %1393 = vmatprep.subr.mxu0 0.0
    %1394 = vmatpush2.msra.mxu0 0.0
    %1395 = vmatprep.subr.mxu0 0.0
    %1396 = vmatpush2.msra.mxu0 0.0
    %1397 = vmatprep.subr.mxu0 0.0
    %1398 = vmatpush2.msra.mxu0 0.0
    %1399 = vmatprep.subr.mxu0 0.0
    %1400 = vmatpush2.msra.mxu0 0.0
    %1401 = vmatprep.subr.mxu0 0.0
    %1402 = vmatpush2.msra.mxu0 0.0
    %1403 = vmatprep.subr.mxu0 0.0
    %1404 = vmatpush2.msra.mxu0 0.0
    %1405 = vmatprep.subr.mxu0 0.0
    %1406 = vmatpush2.msra.mxu0 0.0
    %1407 = vmatprep.subr.mxu0 0.0
    %1408 = vmatpush2.msra.mxu0 0.0
    %1409 = vmatprep.subr.mxu0 0.0
    %1410 = vmatpush2.msra.mxu0 0.0
    %1411 = vmatprep.mubr.f32.mxu0 0.0
    %1412 = vmatmul.mubr.f32.gmra.mxu0 %v1345
    %v1413 = vpop.f32.mrf.mxu0
    %v1414 = vadd.f32 %v1305, %v1413
    %v1415 = vpop.f32.mrf.mxu0
    %v1416 = vadd.f32 %v1309, %v1415
    %1417 = vdwg.mxu0
    %1418 = vmatprep.subr.mxu0 %v1295
    %1419 = vmatpush1.msra.mxu0 %v1294
    %1420 = vmatprep.subr.mxu0 %v1287
    %1421 = vmatpush1.msra.mxu0 %v1286
    %1422 = vmatprep.subr.mxu0 %v1279
    %1423 = vmatpush1.msra.mxu0 %v1278
    %1424 = vmatprep.subr.mxu0 %v1271
    %1425 = vmatpush1.msra.mxu0 %v1270
    %1426 = vmatprep.subr.mxu0 %v1263
    %1427 = vmatpush1.msra.mxu0 %v1262
    %1428 = vmatprep.subr.mxu0 %v1255
    %1429 = vmatpush1.msra.mxu0 %v1254
    %1430 = vmatprep.subr.mxu0 %v1247
    %1431 = vmatpush1.msra.mxu0 %v1246
    %1432 = vmatprep.subr.mxu0 %v1239
    %1433 = vmatpush1.msra.mxu0 %v1238
    %1434 = vmatprep.subr.mxu0 %v1231
    %1435 = vmatpush1.msra.mxu0 %v1230
    %1436 = vmatprep.subr.mxu0 %v1223
    %1437 = vmatpush1.msra.mxu0 %v1222
    %1438 = vmatprep.subr.mxu0 %v1215
    %1439 = vmatpush1.msra.mxu0 %v1214
    %1440 = vmatprep.subr.mxu0 %v1207
    %1441 = vmatpush1.msra.mxu0 %v1206
    %1442 = vmatprep.subr.mxu0 %v1199
    %1443 = vmatpush1.msra.mxu0 %v1198
    %1444 = vmatprep.subr.mxu0 %v1191
    %1445 = vmatpush1.msra.mxu0 %v1190
    %1446 = vmatprep.subr.mxu0 %v1183
    %1447 = vmatpush1.msra.mxu0 %v1182
    %1448 = vmatprep.subr.mxu0 %v1175
    %1449 = vmatpush1.msra.mxu0 %v1174
    %1450 = vmatprep.subr.mxu0 0.0
    %1451 = vmatpush2.msra.mxu0 0.0
    %1452 = vmatprep.subr.mxu0 0.0
    %1453 = vmatpush2.msra.mxu0 0.0
    %1454 = vmatprep.subr.mxu0 0.0
    %1455 = vmatpush2.msra.mxu0 0.0
    %1456 = vmatprep.subr.mxu0 0.0
    %1457 = vmatpush2.msra.mxu0 0.0
    %1458 = vmatprep.subr.mxu0 0.0
    %1459 = vmatpush2.msra.mxu0 0.0
    %1460 = vmatprep.subr.mxu0 0.0
    %1461 = vmatpush2.msra.mxu0 0.0
    %1462 = vmatprep.subr.mxu0 0.0
    %1463 = vmatpush2.msra.mxu0 0.0
    %1464 = vmatprep.subr.mxu0 0.0
    %1465 = vmatpush2.msra.mxu0 0.0
    %1466 = vmatprep.subr.mxu0 0.0
    %1467 = vmatpush2.msra.mxu0 0.0
    %1468 = vmatprep.subr.mxu0 0.0
    %1469 = vmatpush2.msra.mxu0 0.0
    %1470 = vmatprep.subr.mxu0 0.0
    %1471 = vmatpush2.msra.mxu0 0.0
    %1472 = vmatprep.subr.mxu0 0.0
    %1473 = vmatpush2.msra.mxu0 0.0
    %1474 = vmatprep.subr.mxu0 0.0
    %1475 = vmatpush2.msra.mxu0 0.0
    %1476 = vmatprep.subr.mxu0 0.0
    %1477 = vmatpush2.msra.mxu0 0.0
    %1478 = vmatprep.subr.mxu0 0.0
    %1479 = vmatpush2.msra.mxu0 0.0
    %1480 = vmatprep.subr.mxu0 0.0
    %1481 = vmatpush2.msra.mxu0 0.0
    %1482 = vmatprep.mubr.f32.mxu0 0.0
    %1483 = vmatmul.mubr.f32.gmra.mxu0 %v1345
    %v1484 = vpop.f32.mrf.mxu0
    %v1485 = vadd.f32 %v1313, %v1484
    %v1486 = vpop.f32.mrf.mxu0
    %v1487 = vadd.f32 %v1317, %v1486
    %1488 = vdwg.mxu0
    %1489 = vmatprep.subr.mxu0 %v1297
    %1490 = vmatpush1.msra.mxu0 %v1296
    %1491 = vmatprep.subr.mxu0 %v1289
    %1492 = vmatpush1.msra.mxu0 %v1288
    %1493 = vmatprep.subr.mxu0 %v1281
    %1494 = vmatpush1.msra.mxu0 %v1280
    %1495 = vmatprep.subr.mxu0 %v1273
    %1496 = vmatpush1.msra.mxu0 %v1272
    %1497 = vmatprep.subr.mxu0 %v1265
    %1498 = vmatpush1.msra.mxu0 %v1264
    %1499 = vmatprep.subr.mxu0 %v1257
    %1500 = vmatpush1.msra.mxu0 %v1256
    %1501 = vmatprep.subr.mxu0 %v1249
    %1502 = vmatpush1.msra.mxu0 %v1248
    %1503 = vmatprep.subr.mxu0 %v1241
    %1504 = vmatpush1.msra.mxu0 %v1240
    %1505 = vmatprep.subr.mxu0 %v1233
    %1506 = vmatpush1.msra.mxu0 %v1232
    %1507 = vmatprep.subr.mxu0 %v1225
    %1508 = vmatpush1.msra.mxu0 %v1224
    %1509 = vmatprep.subr.mxu0 %v1217
    %1510 = vmatpush1.msra.mxu0 %v1216
    %1511 = vmatprep.subr.mxu0 %v1209
    %1512 = vmatpush1.msra.mxu0 %v1208
    %1513 = vmatprep.subr.mxu0 %v1201
    %1514 = vmatpush1.msra.mxu0 %v1200
    %1515 = vmatprep.subr.mxu0 %v1193
    %1516 = vmatpush1.msra.mxu0 %v1192
    %1517 = vmatprep.subr.mxu0 %v1185
    %1518 = vmatpush1.msra.mxu0 %v1184
    %1519 = vmatprep.subr.mxu0 %v1177
    %1520 = vmatpush1.msra.mxu0 %v1176
    %1521 = vmatprep.subr.mxu0 0.0
    %1522 = vmatpush2.msra.mxu0 0.0
    %1523 = vmatprep.subr.mxu0 0.0
    %1524 = vmatpush2.msra.mxu0 0.0
    %1525 = vmatprep.subr.mxu0 0.0
    %1526 = vmatpush2.msra.mxu0 0.0
    %1527 = vmatprep.subr.mxu0 0.0
    %1528 = vmatpush2.msra.mxu0 0.0
    %1529 = vmatprep.subr.mxu0 0.0
    %1530 = vmatpush2.msra.mxu0 0.0
    %1531 = vmatprep.subr.mxu0 0.0
    %1532 = vmatpush2.msra.mxu0 0.0
    %1533 = vmatprep.subr.mxu0 0.0
    %1534 = vmatpush2.msra.mxu0 0.0
    %1535 = vmatprep.subr.mxu0 0.0
    %1536 = vmatpush2.msra.mxu0 0.0
    %1537 = vmatprep.subr.mxu0 0.0
    %1538 = vmatpush2.msra.mxu0 0.0
    %1539 = vmatprep.subr.mxu0 0.0
    %1540 = vmatpush2.msra.mxu0 0.0
    %1541 = vmatprep.subr.mxu0 0.0
    %1542 = vmatpush2.msra.mxu0 0.0
    %1543 = vmatprep.subr.mxu0 0.0
    %1544 = vmatpush2.msra.mxu0 0.0
    %1545 = vmatprep.subr.mxu0 0.0
    %1546 = vmatpush2.msra.mxu0 0.0
    %1547 = vmatprep.subr.mxu0 0.0
    %1548 = vmatpush2.msra.mxu0 0.0
    %1549 = vmatprep.subr.mxu0 0.0
    %1550 = vmatpush2.msra.mxu0 0.0
    %1551 = vmatprep.subr.mxu0 0.0
    %1552 = vmatpush2.msra.mxu0 0.0
    %1553 = vmatprep.mubr.f32.mxu0 0.0
    %1554 = vmatmul.mubr.f32.gmra.mxu0 %v1345
    %v1555 = vpop.f32.mrf.mxu0
    %v1556 = vadd.f32 %v1321, %v1555
    %v1557 = vpop.f32.mrf.mxu0
    %v1558 = vadd.f32 %v1325, %v1557
    %1559 = vdwg.mxu0
    %1560 = vmatprep.subr.mxu0 %v1299
    %1561 = vmatpush1.msra.mxu0 %v1298
    %1562 = vmatprep.subr.mxu0 %v1291
    %1563 = vmatpush1.msra.mxu0 %v1290
    %1564 = vmatprep.subr.mxu0 %v1283
    %1565 = vmatpush1.msra.mxu0 %v1282
    %1566 = vmatprep.subr.mxu0 %v1275
    %1567 = vmatpush1.msra.mxu0 %v1274
    %1568 = vmatprep.subr.mxu0 %v1267
    %1569 = vmatpush1.msra.mxu0 %v1266
    %1570 = vmatprep.subr.mxu0 %v1259
    %1571 = vmatpush1.msra.mxu0 %v1258
    %1572 = vmatprep.subr.mxu0 %v1251
    %1573 = vmatpush1.msra.mxu0 %v1250
    %1574 = vmatprep.subr.mxu0 %v1243
    %1575 = vmatpush1.msra.mxu0 %v1242
    %1576 = vmatprep.subr.mxu0 %v1235
    %1577 = vmatpush1.msra.mxu0 %v1234
    %1578 = vmatprep.subr.mxu0 %v1227
    %1579 = vmatpush1.msra.mxu0 %v1226
    %1580 = vmatprep.subr.mxu0 %v1219
    %1581 = vmatpush1.msra.mxu0 %v1218
    %1582 = vmatprep.subr.mxu0 %v1211
    %1583 = vmatpush1.msra.mxu0 %v1210
    %1584 = vmatprep.subr.mxu0 %v1203
    %1585 = vmatpush1.msra.mxu0 %v1202
    %1586 = vmatprep.subr.mxu0 %v1195
    %1587 = vmatpush1.msra.mxu0 %v1194
    %1588 = vmatprep.subr.mxu0 %v1187
    %1589 = vmatpush1.msra.mxu0 %v1186
    %1590 = vmatprep.subr.mxu0 %v1179
    %1591 = vmatpush1.msra.mxu0 %v1178
    %1592 = vmatprep.subr.mxu0 0.0
    %1593 = vmatpush2.msra.mxu0 0.0
    %1594 = vmatprep.subr.mxu0 0.0
    %1595 = vmatpush2.msra.mxu0 0.0
    %1596 = vmatprep.subr.mxu0 0.0
    %1597 = vmatpush2.msra.mxu0 0.0
    %1598 = vmatprep.subr.mxu0 0.0
    %1599 = vmatpush2.msra.mxu0 0.0
    %1600 = vmatprep.subr.mxu0 0.0
    %1601 = vmatpush2.msra.mxu0 0.0
    %1602 = vmatprep.subr.mxu0 0.0
    %1603 = vmatpush2.msra.mxu0 0.0
    %1604 = vmatprep.subr.mxu0 0.0
    %1605 = vmatpush2.msra.mxu0 0.0
    %1606 = vmatprep.subr.mxu0 0.0
    %1607 = vmatpush2.msra.mxu0 0.0
    %1608 = vmatprep.subr.mxu0 0.0
    %1609 = vmatpush2.msra.mxu0 0.0
    %1610 = vmatprep.subr.mxu0 0.0
    %1611 = vmatpush2.msra.mxu0 0.0
    %1612 = vmatprep.subr.mxu0 0.0
    %1613 = vmatpush2.msra.mxu0 0.0
    %1614 = vmatprep.subr.mxu0 0.0
    %1615 = vmatpush2.msra.mxu0 0.0
    %1616 = vmatprep.subr.mxu0 0.0
    %1617 = vmatpush2.msra.mxu0 0.0
    %1618 = vmatprep.subr.mxu0 0.0
    %1619 = vmatpush2.msra.mxu0 0.0
    %1620 = vmatprep.subr.mxu0 0.0
    %1621 = vmatpush2.msra.mxu0 0.0
    %1622 = vmatprep.subr.mxu0 0.0
    %1623 = vmatpush2.msra.mxu0 0.0
    %1624 = vmatprep.mubr.f32.mxu0 0.0
    %1625 = vmatmul.mubr.f32.gmra.mxu0 %v1345
    %v1626 = vpop.f32.mrf.mxu0
    %v1627 = vadd.f32 %v1329, %v1626
    %v1628 = vpop.f32.mrf.mxu0
    %v1629 = vadd.f32 %v1333, %v1628
    %1630 = vdwg.mxu0
    %v1631 = vmax.f32 %v1414, 0.0
    %v1632 = vmax.f32 %v1416, 0.0
    %v1633 = vmax.f32 %v1485, 0.0
    %v1634 = vmax.f32 %v1487, 0.0
    %v1635 = vmax.f32 %v1556, 0.0
    %v1636 = vmax.f32 %v1558, 0.0
    %v1637 = vmax.f32 %v1627, 0.0
    %v1638 = vmax.f32 %v1629, 0.0
    %v1639 = vld [vmem:[#allocation5] sm:$0xff]
    %v1640 = vld [vmem:[#allocation5 + $0x8] sm:$0xff]
    %v1641 = vld [vmem:[#allocation5 + $0x10] sm:$0xff]
    %v1642 = vld [vmem:[#allocation5 + $0x18] sm:$0xff]
    %v1643 = vld [vmem:[#allocation5 + $0x20] sm:$0xff]
    %v1644 = vld [vmem:[#allocation5 + $0x28] sm:$0xff]
    %v1645 = vld [vmem:[#allocation5 + $0x30] sm:$0xff]
    %v1646 = vld [vmem:[#allocation5 + $0x38] sm:$0xff]
    %v1647 = vld [vmem:[#allocation5 + $0x40] sm:$0xff]
    %v1648 = vld [vmem:[#allocation5 + $0x48] sm:$0xff]
    %v1649 = vld [vmem:[#allocation5 + $0x50] sm:$0xff]
    %v1650 = vld [vmem:[#allocation5 + $0x58] sm:$0xff]
    %v1651 = vld [vmem:[#allocation5 + $0x60] sm:$0xff]
    %v1652 = vld [vmem:[#allocation5 + $0x68] sm:$0xff]
    %v1653 = vld [vmem:[#allocation5 + $0x70] sm:$0xff]
    %v1654 = vld [vmem:[#allocation5 + $0x78] sm:$0xff]
    %v1655 = vld [vmem:[#allocation5 + $0x80] sm:$0xff]
    %v1656 = vld [vmem:[#allocation5 + $0x88] sm:$0xff]
    %v1657 = vld [vmem:[#allocation5 + $0x90] sm:$0xff]
    %v1658 = vld [vmem:[#allocation5 + $0x98] sm:$0xff]
    %v1659 = vld [vmem:[#allocation5 + $0xa0] sm:$0xff]
    %v1660 = vld [vmem:[#allocation5 + $0xa8] sm:$0xff]
    %v1661 = vld [vmem:[#allocation5 + $0xb0] sm:$0xff]
    %v1662 = vld [vmem:[#allocation5 + $0xb8] sm:$0xff]
    %v1663 = vld [vmem:[#allocation5 + $0xc0] sm:$0xff]
    %v1664 = vld [vmem:[#allocation5 + $0xc8] sm:$0xff]
    %v1665 = vld [vmem:[#allocation5 + $0xd0] sm:$0xff]
    %v1666 = vld [vmem:[#allocation5 + $0xd8] sm:$0xff]
    %v1667 = vld [vmem:[#allocation5 + $0xe0] sm:$0xff]
    %v1668 = vld [vmem:[#allocation5 + $0xe8] sm:$0xff]
    %v1669 = vld [vmem:[#allocation5 + $0xf0] sm:$0xff]
    %v1670 = vld [vmem:[#allocation5 + $0xf8] sm:$0xff]
    %v1671 = vld [vmem:[#allocation5 + $0x100] sm:$0xff]
    %v1672 = vld [vmem:[#allocation5 + $0x108] sm:$0xff]
    %v1673 = vld [vmem:[#allocation5 + $0x110] sm:$0xff]
    %v1674 = vld [vmem:[#allocation5 + $0x118] sm:$0xff]
    %v1675 = vld [vmem:[#allocation5 + $0x120] sm:$0xff]
    %v1676 = vld [vmem:[#allocation5 + $0x128] sm:$0xff]
    %v1677 = vld [vmem:[#allocation5 + $0x130] sm:$0xff]
    %v1678 = vld [vmem:[#allocation5 + $0x138] sm:$0xff]
    %v1679 = vld [vmem:[#allocation5 + $0x140] sm:$0xff]
    %v1680 = vld [vmem:[#allocation5 + $0x148] sm:$0xff]
    %v1681 = vld [vmem:[#allocation5 + $0x150] sm:$0xff]
    %v1682 = vld [vmem:[#allocation5 + $0x158] sm:$0xff]
    %v1683 = vld [vmem:[#allocation5 + $0x160] sm:$0xff]
    %v1684 = vld [vmem:[#allocation5 + $0x168] sm:$0xff]
    %v1685 = vld [vmem:[#allocation5 + $0x170] sm:$0xff]
    %v1686 = vld [vmem:[#allocation5 + $0x178] sm:$0xff]
    %v1687 = vld [vmem:[#allocation5 + $0x180] sm:$0xff]
    %v1688 = vld [vmem:[#allocation5 + $0x188] sm:$0xff]
    %v1689 = vld [vmem:[#allocation5 + $0x190] sm:$0xff]
    %v1690 = vld [vmem:[#allocation5 + $0x198] sm:$0xff]
    %v1691 = vld [vmem:[#allocation5 + $0x1a0] sm:$0xff]
    %v1692 = vld [vmem:[#allocation5 + $0x1a8] sm:$0xff]
    %v1693 = vld [vmem:[#allocation5 + $0x1b0] sm:$0xff]
    %v1694 = vld [vmem:[#allocation5 + $0x1b8] sm:$0xff]
    %v1695 = vld [vmem:[#allocation5 + $0x1c0] sm:$0xff]
    %v1696 = vld [vmem:[#allocation5 + $0x1c8] sm:$0xff]
    %v1697 = vld [vmem:[#allocation5 + $0x1d0] sm:$0xff]
    %v1698 = vld [vmem:[#allocation5 + $0x1d8] sm:$0xff]
    %v1699 = vld [vmem:[#allocation5 + $0x1e0] sm:$0xff]
    %v1700 = vld [vmem:[#allocation5 + $0x1e8] sm:$0xff]
    %v1701 = vld [vmem:[#allocation5 + $0x1f0] sm:$0xff]
    %v1702 = vld [vmem:[#allocation5 + $0x1f8] sm:$0xff]
    %v1703 = vld [vmem:[#allocation5 + $0x200] sm:$0xff]
    %v1704 = vld [vmem:[#allocation5 + $0x208] sm:$0xff]
    %v1705 = vld [vmem:[#allocation5 + $0x210] sm:$0xff]
    %v1706 = vld [vmem:[#allocation5 + $0x218] sm:$0xff]
    %v1707 = vld [vmem:[#allocation5 + $0x220] sm:$0xff]
    %v1708 = vld [vmem:[#allocation5 + $0x228] sm:$0xff]
    %v1709 = vld [vmem:[#allocation5 + $0x230] sm:$0xff]
    %v1710 = vld [vmem:[#allocation5 + $0x238] sm:$0xff]
    %v1711 = vld [vmem:[#allocation5 + $0x240] sm:$0xff]
    %v1712 = vld [vmem:[#allocation5 + $0x248] sm:$0xff]
    %v1713 = vld [vmem:[#allocation5 + $0x250] sm:$0xff]
    %v1714 = vld [vmem:[#allocation5 + $0x258] sm:$0xff]
    %v1715 = vld [vmem:[#allocation5 + $0x260] sm:$0xff]
    %v1716 = vld [vmem:[#allocation5 + $0x268] sm:$0xff]
    %v1717 = vld [vmem:[#allocation5 + $0x270] sm:$0xff]
    %v1718 = vld [vmem:[#allocation5 + $0x278] sm:$0xff]
    %v1719 = vld [vmem:[#allocation5 + $0x280] sm:$0xff]
    %v1720 = vld [vmem:[#allocation5 + $0x288] sm:$0xff]
    %v1721 = vld [vmem:[#allocation5 + $0x290] sm:$0xff]
    %v1722 = vld [vmem:[#allocation5 + $0x298] sm:$0xff]
    %v1723 = vld [vmem:[#allocation5 + $0x2a0] sm:$0xff]
    %v1724 = vld [vmem:[#allocation5 + $0x2a8] sm:$0xff]
    %v1725 = vld [vmem:[#allocation5 + $0x2b0] sm:$0xff]
    %v1726 = vld [vmem:[#allocation5 + $0x2b8] sm:$0xff]
    %v1727 = vld [vmem:[#allocation5 + $0x2c0] sm:$0xff]
    %v1728 = vld [vmem:[#allocation5 + $0x2c8] sm:$0xff]
    %v1729 = vld [vmem:[#allocation5 + $0x2d0] sm:$0xff]
    %v1730 = vld [vmem:[#allocation5 + $0x2d8] sm:$0xff]
    %v1731 = vld [vmem:[#allocation5 + $0x2e0] sm:$0xff]
    %v1732 = vld [vmem:[#allocation5 + $0x2e8] sm:$0xff]
    %v1733 = vld [vmem:[#allocation5 + $0x2f0] sm:$0xff]
    %v1734 = vld [vmem:[#allocation5 + $0x2f8] sm:$0xff]
    %v1735 = vld [vmem:[#allocation5 + $0x300] sm:$0xff]
    %v1736 = vld [vmem:[#allocation5 + $0x308] sm:$0xff]
    %v1737 = vld [vmem:[#allocation5 + $0x310] sm:$0xff]
    %v1738 = vld [vmem:[#allocation5 + $0x318] sm:$0xff]
    %v1739 = vld [vmem:[#allocation5 + $0x320] sm:$0xff]
    %v1740 = vld [vmem:[#allocation5 + $0x328] sm:$0xff]
    %v1741 = vld [vmem:[#allocation5 + $0x330] sm:$0xff]
    %v1742 = vld [vmem:[#allocation5 + $0x338] sm:$0xff]
    %v1743 = vld [vmem:[#allocation5 + $0x340] sm:$0xff]
    %v1744 = vld [vmem:[#allocation5 + $0x348] sm:$0xff]
    %v1745 = vld [vmem:[#allocation5 + $0x350] sm:$0xff]
    %v1746 = vld [vmem:[#allocation5 + $0x358] sm:$0xff]
    %v1747 = vld [vmem:[#allocation5 + $0x360] sm:$0xff]
    %v1748 = vld [vmem:[#allocation5 + $0x368] sm:$0xff]
    %v1749 = vld [vmem:[#allocation5 + $0x370] sm:$0xff]
    %v1750 = vld [vmem:[#allocation5 + $0x378] sm:$0xff]
    %v1751 = vld [vmem:[#allocation5 + $0x380] sm:$0xff]
    %v1752 = vld [vmem:[#allocation5 + $0x388] sm:$0xff]
    %v1753 = vld [vmem:[#allocation5 + $0x390] sm:$0xff]
    %v1754 = vld [vmem:[#allocation5 + $0x398] sm:$0xff]
    %v1755 = vld [vmem:[#allocation5 + $0x3a0] sm:$0xff]
    %v1756 = vld [vmem:[#allocation5 + $0x3a8] sm:$0xff]
    %v1757 = vld [vmem:[#allocation5 + $0x3b0] sm:$0xff]
    %v1758 = vld [vmem:[#allocation5 + $0x3b8] sm:$0xff]
    %v1759 = vld [vmem:[#allocation5 + $0x3c0] sm:$0xff]
    %v1760 = vld [vmem:[#allocation5 + $0x3c8] sm:$0xff]
    %v1761 = vld [vmem:[#allocation5 + $0x3d0] sm:$0xff]
    %v1762 = vld [vmem:[#allocation5 + $0x3d8] sm:$0xff]
    %v1763 = vld [vmem:[#allocation5 + $0x3e0] sm:$0xff]
    %v1764 = vld [vmem:[#allocation5 + $0x3e8] sm:$0xff]
    %v1765 = vld [vmem:[#allocation5 + $0x3f0] sm:$0xff]
    %v1766 = vld [vmem:[#allocation5 + $0x3f8] sm:$0xff]
    %v1767 = vld [vmem:[%s12] sm:$0x1]
    %v1769 = vlaneseq
    %v1770 = vshrl.u32 %v1769, 7
    %v1771 = vsub.s32 0, %v1770
    %v1772 = vrot.slane %v1767, %v1771
    %1774 = vmatprep.subr.mxu0 0.0
    %1775 = vmatpush1.msra.mxu0 %v1654
    %1776 = vmatprep.subr.mxu0 0.0
    %1777 = vmatpush1.msra.mxu0 %v1653
    %1778 = vmatprep.subr.mxu0 0.0
    %1779 = vmatpush1.msra.mxu0 %v1652
    %1780 = vmatprep.subr.mxu0 0.0
    %1781 = vmatpush1.msra.mxu0 %v1651
    %1782 = vmatprep.subr.mxu0 0.0
    %1783 = vmatpush1.msra.mxu0 %v1650
    %1784 = vmatprep.subr.mxu0 0.0
    %1785 = vmatpush1.msra.mxu0 %v1649
    %1786 = vmatprep.subr.mxu0 0.0
    %1787 = vmatpush1.msra.mxu0 %v1648
    %1788 = vmatprep.subr.mxu0 0.0
    %1789 = vmatpush1.msra.mxu0 %v1647
    %1790 = vmatprep.subr.mxu0 0.0
    %1791 = vmatpush1.msra.mxu0 %v1646
    %1792 = vmatprep.subr.mxu0 0.0
    %1793 = vmatpush1.msra.mxu0 %v1645
    %1794 = vmatprep.subr.mxu0 0.0
    %1795 = vmatpush1.msra.mxu0 %v1644
    %1796 = vmatprep.subr.mxu0 0.0
    %1797 = vmatpush1.msra.mxu0 %v1643
    %1798 = vmatprep.subr.mxu0 0.0
    %1799 = vmatpush1.msra.mxu0 %v1642
    %1800 = vmatprep.subr.mxu0 0.0
    %1801 = vmatpush1.msra.mxu0 %v1641
    %1802 = vmatprep.subr.mxu0 0.0
    %1803 = vmatpush1.msra.mxu0 %v1640
    %1804 = vmatprep.subr.mxu0 0.0
    %1805 = vmatpush1.msra.mxu0 %v1639
    %1806 = vmatprep.subr.mxu0 0.0
    %1807 = vmatpush2.msra.mxu0 %v1670
    %1808 = vmatprep.subr.mxu0 0.0
    %1809 = vmatpush2.msra.mxu0 %v1669
    %1810 = vmatprep.subr.mxu0 0.0
    %1811 = vmatpush2.msra.mxu0 %v1668
    %1812 = vmatprep.subr.mxu0 0.0
    %1813 = vmatpush2.msra.mxu0 %v1667
    %1814 = vmatprep.subr.mxu0 0.0
    %1815 = vmatpush2.msra.mxu0 %v1666
    %1816 = vmatprep.subr.mxu0 0.0
    %1817 = vmatpush2.msra.mxu0 %v1665
    %1818 = vmatprep.subr.mxu0 0.0
    %1819 = vmatpush2.msra.mxu0 %v1664
    %1820 = vmatprep.subr.mxu0 0.0
    %1821 = vmatpush2.msra.mxu0 %v1663
    %1822 = vmatprep.subr.mxu0 0.0
    %1823 = vmatpush2.msra.mxu0 %v1662
    %1824 = vmatprep.subr.mxu0 0.0
    %1825 = vmatpush2.msra.mxu0 %v1661
    %1826 = vmatprep.subr.mxu0 0.0
    %1827 = vmatpush2.msra.mxu0 %v1660
    %1828 = vmatprep.subr.mxu0 0.0
    %1829 = vmatpush2.msra.mxu0 %v1659
    %1830 = vmatprep.subr.mxu0 0.0
    %1831 = vmatpush2.msra.mxu0 %v1658
    %1832 = vmatprep.subr.mxu0 0.0
    %1833 = vmatpush2.msra.mxu0 %v1657
    %1834 = vmatprep.subr.mxu0 0.0
    %1835 = vmatpush2.msra.mxu0 %v1656
    %1836 = vmatprep.subr.mxu0 0.0
    %1837 = vmatpush2.msra.mxu0 %v1655
    %1838 = vmatprep.mubr.f32.mxu0 %v1632
    %1839 = vmatmul.mubr.f32.gmra.mxu0 %v1631
    %v1840 = vpop.f32.mrf.mxu0
    %v1841 = vadd.f32 %v1772, %v1840
    %v1842 = vpop.f32.mrf.mxu0
    %1843 = vdwg.mxu0
    %1844 = vmatprep.subr.mxu0 0.0
    %1845 = vmatpush1.msra.mxu0 %v1686
    %1846 = vmatprep.subr.mxu0 0.0
    %1847 = vmatpush1.msra.mxu0 %v1685
    %1848 = vmatprep.subr.mxu0 0.0
    %1849 = vmatpush1.msra.mxu0 %v1684
    %1850 = vmatprep.subr.mxu0 0.0
    %1851 = vmatpush1.msra.mxu0 %v1683
    %1852 = vmatprep.subr.mxu0 0.0
    %1853 = vmatpush1.msra.mxu0 %v1682
    %1854 = vmatprep.subr.mxu0 0.0
    %1855 = vmatpush1.msra.mxu0 %v1681
    %1856 = vmatprep.subr.mxu0 0.0
    %1857 = vmatpush1.msra.mxu0 %v1680
    %1858 = vmatprep.subr.mxu0 0.0
    %1859 = vmatpush1.msra.mxu0 %v1679
    %1860 = vmatprep.subr.mxu0 0.0
    %1861 = vmatpush1.msra.mxu0 %v1678
    %1862 = vmatprep.subr.mxu0 0.0
    %1863 = vmatpush1.msra.mxu0 %v1677
    %1864 = vmatprep.subr.mxu0 0.0
    %1865 = vmatpush1.msra.mxu0 %v1676
    %1866 = vmatprep.subr.mxu0 0.0
    %1867 = vmatpush1.msra.mxu0 %v1675
    %1868 = vmatprep.subr.mxu0 0.0
    %1869 = vmatpush1.msra.mxu0 %v1674
    %1870 = vmatprep.subr.mxu0 0.0
    %1871 = vmatpush1.msra.mxu0 %v1673
    %1872 = vmatprep.subr.mxu0 0.0
    %1873 = vmatpush1.msra.mxu0 %v1672
    %1874 = vmatprep.subr.mxu0 0.0
    %1875 = vmatpush1.msra.mxu0 %v1671
    %1876 = vmatprep.subr.mxu0 0.0
    %1877 = vmatpush2.msra.mxu0 %v1702
    %1878 = vmatprep.subr.mxu0 0.0
    %1879 = vmatpush2.msra.mxu0 %v1701
    %1880 = vmatprep.subr.mxu0 0.0
    %1881 = vmatpush2.msra.mxu0 %v1700
    %1882 = vmatprep.subr.mxu0 0.0
    %1883 = vmatpush2.msra.mxu0 %v1699
    %1884 = vmatprep.subr.mxu0 0.0
    %1885 = vmatpush2.msra.mxu0 %v1698
    %1886 = vmatprep.subr.mxu0 0.0
    %1887 = vmatpush2.msra.mxu0 %v1697
    %1888 = vmatprep.subr.mxu0 0.0
    %1889 = vmatpush2.msra.mxu0 %v1696
    %1890 = vmatprep.subr.mxu0 0.0
    %1891 = vmatpush2.msra.mxu0 %v1695
    %1892 = vmatprep.subr.mxu0 0.0
    %1893 = vmatpush2.msra.mxu0 %v1694
    %1894 = vmatprep.subr.mxu0 0.0
    %1895 = vmatpush2.msra.mxu0 %v1693
    %1896 = vmatprep.subr.mxu0 0.0
    %1897 = vmatpush2.msra.mxu0 %v1692
    %1898 = vmatprep.subr.mxu0 0.0
    %1899 = vmatpush2.msra.mxu0 %v1691
    %1900 = vmatprep.subr.mxu0 0.0
    %1901 = vmatpush2.msra.mxu0 %v1690
    %1902 = vmatprep.subr.mxu0 0.0
    %1903 = vmatpush2.msra.mxu0 %v1689
    %1904 = vmatprep.subr.mxu0 0.0
    %1905 = vmatpush2.msra.mxu0 %v1688
    %1906 = vmatprep.subr.mxu0 0.0
    %1907 = vmatpush2.msra.mxu0 %v1687
    %1908 = vmatprep.mubr.f32.mxu0 %v1634
    %1909 = vmatmul.mubr.f32.gmra.mxu0 %v1633
    %v1910 = vpop.f32.mrf.mxu0
    %v1911 = vadd.f32 %v1841, %v1910
    %v1912 = vpop.f32.mrf.mxu0
    %1913 = vdwg.mxu0
    %1914 = vmatprep.subr.mxu0 0.0
    %1915 = vmatpush1.msra.mxu0 %v1718
    %1916 = vmatprep.subr.mxu0 0.0
    %1917 = vmatpush1.msra.mxu0 %v1717
    %1918 = vmatprep.subr.mxu0 0.0
    %1919 = vmatpush1.msra.mxu0 %v1716
    %1920 = vmatprep.subr.mxu0 0.0
    %1921 = vmatpush1.msra.mxu0 %v1715
    %1922 = vmatprep.subr.mxu0 0.0
    %1923 = vmatpush1.msra.mxu0 %v1714
    %1924 = vmatprep.subr.mxu0 0.0
    %1925 = vmatpush1.msra.mxu0 %v1713
    %1926 = vmatprep.subr.mxu0 0.0
    %1927 = vmatpush1.msra.mxu0 %v1712
    %1928 = vmatprep.subr.mxu0 0.0
    %1929 = vmatpush1.msra.mxu0 %v1711
    %1930 = vmatprep.subr.mxu0 0.0
    %1931 = vmatpush1.msra.mxu0 %v1710
    %1932 = vmatprep.subr.mxu0 0.0
    %1933 = vmatpush1.msra.mxu0 %v1709
    %1934 = vmatprep.subr.mxu0 0.0
    %1935 = vmatpush1.msra.mxu0 %v1708
    %1936 = vmatprep.subr.mxu0 0.0
    %1937 = vmatpush1.msra.mxu0 %v1707
    %1938 = vmatprep.subr.mxu0 0.0
    %1939 = vmatpush1.msra.mxu0 %v1706
    %1940 = vmatprep.subr.mxu0 0.0
    %1941 = vmatpush1.msra.mxu0 %v1705
    %1942 = vmatprep.subr.mxu0 0.0
    %1943 = vmatpush1.msra.mxu0 %v1704
    %1944 = vmatprep.subr.mxu0 0.0
    %1945 = vmatpush1.msra.mxu0 %v1703
    %1946 = vmatprep.subr.mxu0 0.0
    %1947 = vmatpush2.msra.mxu0 %v1734
    %1948 = vmatprep.subr.mxu0 0.0
    %1949 = vmatpush2.msra.mxu0 %v1733
    %1950 = vmatprep.subr.mxu0 0.0
    %1951 = vmatpush2.msra.mxu0 %v1732
    %1952 = vmatprep.subr.mxu0 0.0
    %1953 = vmatpush2.msra.mxu0 %v1731
    %1954 = vmatprep.subr.mxu0 0.0
    %1955 = vmatpush2.msra.mxu0 %v1730
    %1956 = vmatprep.subr.mxu0 0.0
    %1957 = vmatpush2.msra.mxu0 %v1729
    %1958 = vmatprep.subr.mxu0 0.0
    %1959 = vmatpush2.msra.mxu0 %v1728
    %1960 = vmatprep.subr.mxu0 0.0
    %1961 = vmatpush2.msra.mxu0 %v1727
    %1962 = vmatprep.subr.mxu0 0.0
    %1963 = vmatpush2.msra.mxu0 %v1726
    %1964 = vmatprep.subr.mxu0 0.0
    %1965 = vmatpush2.msra.mxu0 %v1725
    %1966 = vmatprep.subr.mxu0 0.0
    %1967 = vmatpush2.msra.mxu0 %v1724
    %1968 = vmatprep.subr.mxu0 0.0
    %1969 = vmatpush2.msra.mxu0 %v1723
    %1970 = vmatprep.subr.mxu0 0.0
    %1971 = vmatpush2.msra.mxu0 %v1722
    %1972 = vmatprep.subr.mxu0 0.0
    %1973 = vmatpush2.msra.mxu0 %v1721
    %1974 = vmatprep.subr.mxu0 0.0
    %1975 = vmatpush2.msra.mxu0 %v1720
    %1976 = vmatprep.subr.mxu0 0.0
    %1977 = vmatpush2.msra.mxu0 %v1719
    %1978 = vmatprep.mubr.f32.mxu0 %v1636
    %1979 = vmatmul.mubr.f32.gmra.mxu0 %v1635
    %v1980 = vpop.f32.mrf.mxu0
    %v1981 = vadd.f32 %v1911, %v1980
    %v1982 = vpop.f32.mrf.mxu0
    %1983 = vdwg.mxu0
    %1984 = vmatprep.subr.mxu0 0.0
    %1985 = vmatpush1.msra.mxu0 %v1750
    %1986 = vmatprep.subr.mxu0 0.0
    %1987 = vmatpush1.msra.mxu0 %v1749
    %1988 = vmatprep.subr.mxu0 0.0
    %1989 = vmatpush1.msra.mxu0 %v1748
    %1990 = vmatprep.subr.mxu0 0.0
    %1991 = vmatpush1.msra.mxu0 %v1747
    %1992 = vmatprep.subr.mxu0 0.0
    %1993 = vmatpush1.msra.mxu0 %v1746
    %1994 = vmatprep.subr.mxu0 0.0
    %1995 = vmatpush1.msra.mxu0 %v1745
    %1996 = vmatprep.subr.mxu0 0.0
    %1997 = vmatpush1.msra.mxu0 %v1744
    %1998 = vmatprep.subr.mxu0 0.0
    %1999 = vmatpush1.msra.mxu0 %v1743
    %2000 = vmatprep.subr.mxu0 0.0
    %2001 = vmatpush1.msra.mxu0 %v1742
    %2002 = vmatprep.subr.mxu0 0.0
    %2003 = vmatpush1.msra.mxu0 %v1741
    %2004 = vmatprep.subr.mxu0 0.0
    %2005 = vmatpush1.msra.mxu0 %v1740
    %2006 = vmatprep.subr.mxu0 0.0
    %2007 = vmatpush1.msra.mxu0 %v1739
    %2008 = vmatprep.subr.mxu0 0.0
    %2009 = vmatpush1.msra.mxu0 %v1738
    %2010 = vmatprep.subr.mxu0 0.0
    %2011 = vmatpush1.msra.mxu0 %v1737
    %2012 = vmatprep.subr.mxu0 0.0
    %2013 = vmatpush1.msra.mxu0 %v1736
    %2014 = vmatprep.subr.mxu0 0.0
    %2015 = vmatpush1.msra.mxu0 %v1735
    %2016 = vmatprep.subr.mxu0 0.0
    %2017 = vmatpush2.msra.mxu0 %v1766
    %2018 = vmatprep.subr.mxu0 0.0
    %2019 = vmatpush2.msra.mxu0 %v1765
    %2020 = vmatprep.subr.mxu0 0.0
    %2021 = vmatpush2.msra.mxu0 %v1764
    %2022 = vmatprep.subr.mxu0 0.0
    %2023 = vmatpush2.msra.mxu0 %v1763
    %2024 = vmatprep.subr.mxu0 0.0
    %2025 = vmatpush2.msra.mxu0 %v1762
    %2026 = vmatprep.subr.mxu0 0.0
    %2027 = vmatpush2.msra.mxu0 %v1761
    %2028 = vmatprep.subr.mxu0 0.0
    %2029 = vmatpush2.msra.mxu0 %v1760
    %2030 = vmatprep.subr.mxu0 0.0
    %2031 = vmatpush2.msra.mxu0 %v1759
    %2032 = vmatprep.subr.mxu0 0.0
    %2033 = vmatpush2.msra.mxu0 %v1758
    %2034 = vmatprep.subr.mxu0 0.0
    %2035 = vmatpush2.msra.mxu0 %v1757
    %2036 = vmatprep.subr.mxu0 0.0
    %2037 = vmatpush2.msra.mxu0 %v1756
    %2038 = vmatprep.subr.mxu0 0.0
    %2039 = vmatpush2.msra.mxu0 %v1755
    %2040 = vmatprep.subr.mxu0 0.0
    %2041 = vmatpush2.msra.mxu0 %v1754
    %2042 = vmatprep.subr.mxu0 0.0
    %2043 = vmatpush2.msra.mxu0 %v1753
    %2044 = vmatprep.subr.mxu0 0.0
    %2045 = vmatpush2.msra.mxu0 %v1752
    %2046 = vmatprep.subr.mxu0 0.0
    %2047 = vmatpush2.msra.mxu0 %v1751
    %2048 = vmatprep.mubr.f32.mxu0 %v1638
    %2049 = vmatmul.mubr.f32.gmra.mxu0 %v1637
    %v2050 = vpop.f32.mrf.mxu0
    %v2051 = vadd.f32 %v1981, %v2050
    %v2052 = vpop.f32.mrf.mxu0
    %2053 = vdwg.mxu0
    %v2054 = vmax.f32 %v2051, 0.0
    %v2055 = vand.u32 2147483647, %v2051
    %v2056 = vsub.f32 0.0, %v2055
    %v2057 = vmul.f32 %v2056, 1.442695
    %v2058 = vpow.pop %v2057
    %v2059 = vadd.f32 %v2058, 1.0
    %v2060 = vlog2.pop %v2059
    %v2061 = vmul.f32 %v2060, 0.6931472
    %v2062 = vadd.f32 %v2054, %v2061
    %2063 = vst [vmem:[#allocation7] sm:$0x3] %v2062
    // Predicated region
    $region62: #{tpu_custom_call.1} parent=1 // pred_check
      _
    $region63: #{tpu_custom_call.1} parent=1 // pred_check_branch
      %2065 = sbr.rel (0) target = $region65
    $region64: #{tpu_custom_call.1} parent=1 // pred_region
      %s2067 = ssub.s32 32, 32
      %2068 = vsyncadd [#allocation4], %s2067
      %s2070 = sshll.u32 [#allocation7], 4
      %s2071 = int_to_ptr.vmem [resolvable:$true] %s2070
      %2073 = dma.vmem_to_hbm [thread:$0]  %s2071, 32, %s13, [#allocation4]
    $region65: #{tpu_custom_call.1} parent=1 // pred_fallthru
      _
    // Predicated region
    $region66: #{tpu_custom_call.1} parent=1 // pred_check
      _
    $region67: #{tpu_custom_call.1} parent=1 // pred_check_branch
      %2075 = sbr.rel (0) target = $region69
    $region68: #{tpu_custom_call.1} parent=1 // pred_region
      %2076 = dma.done [#allocation4], 32
    $region69: #{tpu_custom_call.1} parent=1 // pred_fallthru
      _
    %2077 = vsyncpa [#allocation3], 1
    %2078 = vsyncpa [#allocation6], 1
    %2079 = vsyncpa [#allocation4], 1

</llo_original>
